<compile_context>
chip_gen: v6e
topology: v6e:2x2x1
jax: 0.10.0
libtpu: 0.0.40
codegen_flags: <defaults>
</compile_context>

<pallas_src>
import jax
import jax.numpy as jnp
from jax.experimental import pallas as pl
from jax.experimental.pallas import tpu as pltpu

# Logical / padded sizes of the MLP.
_H1, _H2 = 400, 300           # original hidden widths
_H1P, _H2P = 512, 384         # lane-padded hidden widths (multiples of 128)
_OUTP = 8                     # narrow padded output (q1 -> lane 0, q2 -> lane 1)

_PACKED_KEYS = ("w14", "b14", "w2", "b2", "w5", "b5", "w3", "w6", "b36")


def _round_up(x, m):
    return ((x + m - 1) // m) * m


# --------------------------------------------------------------------------
# Kernel
# --------------------------------------------------------------------------
def _critic_kernel(sa_ref,
                   w14_ref, b14_ref,
                   w2_ref, b2_ref, w5_ref, b5_ref,
                   w3_ref, w6_ref, b36_ref,
                   out_ref):
    cdt = w14_ref.dtype                     # MXU/epilogue compute dtype (f32 or bf16)
    sa = sa_ref[...].astype(cdt)            # (TB, S+A)

    # Fused layer 1 / 4: one matmul against (S+A, 2*H1P), both branches packed
    # along N.  f32 MXU accumulation; bias + ReLU in the compute dtype.
    h = jnp.dot(sa, w14_ref[...], preferred_element_type=jnp.float32)
    h = jnp.maximum(h.astype(cdt) + b14_ref[...], 0.0)          # (TB, 2*H1P)

    h1 = h[:, :_H1P]                        # branch-1 hidden (vreg-aligned slice)
    h2 = h[:, _H1P:]                        # branch-2 hidden

    # Layer 2 / 5 (independent matmuls -> MXU/VPU overlap).
    g1 = jnp.dot(h1, w2_ref[...], preferred_element_type=jnp.float32)
    g1 = jnp.maximum(g1.astype(cdt) + b2_ref[...], 0.0)         # (TB, H2P)
    g2 = jnp.dot(h2, w5_ref[...], preferred_element_type=jnp.float32)
    g2 = jnp.maximum(g2.astype(cdt) + b5_ref[...], 0.0)

    # Layer 3 / 6 off the MXU: lane-wise multiply + cross-lane reduce (VPU/XLU).
    q1 = jnp.sum((g1 * w3_ref[...]).astype(jnp.float32), axis=-1, keepdims=True)
    q2 = jnp.sum((g2 * w6_ref[...]).astype(jnp.float32), axis=-1, keepdims=True)

    # Pack q1 into lane 0, q2 into lane 1 of the narrow 8-lane output.
    col = jax.lax.broadcasted_iota(jnp.int32, (out_ref.shape[0], _OUTP), 1)
    out = jnp.where(col == 0, q1, jnp.where(col == 1, q2, 0.0)) + b36_ref[...]
    out_ref[...] = out.astype(out_ref.dtype)


# --------------------------------------------------------------------------
# Parameter init (nn.Linear-like) and packing into the padded/fused layout
# --------------------------------------------------------------------------
def init_critic_params(key, state_dim, action_dim):
    """U(-1/sqrt(fan_in), 1/sqrt(fan_in)) init; weights stored (in, out), f32."""
    def linear(k, fan_in, fan_out):
        kw, kb = jax.random.split(k)
        bound = 1.0 / jnp.sqrt(fan_in)
        w = jax.random.uniform(kw, (fan_in, fan_out), jnp.float32, -bound, bound)
        b = jax.random.uniform(kb, (1, fan_out), jnp.float32, -bound, bound)
        return w, b

    in_dim = state_dim + action_dim
    keys = jax.random.split(key, 6)
    w1, b1 = linear(keys[0], in_dim, _H1)
    w2, b2 = linear(keys[1], _H1, _H2)
    w3, b3 = linear(keys[2], _H2, 1)
    w4, b4 = linear(keys[3], in_dim, _H1)
    w5, b5 = linear(keys[4], _H1, _H2)
    w6, b6 = linear(keys[5], _H2, 1)
    return dict(w1=w1, b1=b1, w2=w2, b2=b2, w3=w3, b3=b3,
                w4=w4, b4=b4, w5=w5, b5=b5, w6=w6, b6=b6)


def pack_critic_params(p, state_dim, action_dim, compute_dtype=jnp.bfloat16):
    """Pack/pad/fuse the six Linear layers into the kernel's layout.

    Zero padding keeps padded lanes inert (ReLU(0)=0, zero weight rows).
    Weights AND biases are cast to `compute_dtype` so the whole epilogue runs
    in that dtype (use jnp.float32 for the exact path / on v5e which has no
    bf16 VPU).  The final (q1,q2) bias stays f32.
    """
    in_dim = state_dim + action_dim

    # Fused layer 1/4 weight over the concatenated input; branches packed along N.
    w14 = jnp.zeros((in_dim, 2 * _H1P), jnp.float32)
    w14 = w14.at[:, :_H1].set(p["w1"]).at[:, _H1P:_H1P + _H1].set(p["w4"])
    b14 = jnp.zeros((1, 2 * _H1P), jnp.float32)
    b14 = b14.at[:, :_H1].set(p["b1"]).at[:, _H1P:_H1P + _H1].set(p["b4"])

    # Layer 2 / 5, padded 400->512 (K) and 300->384 (N).
    w2p = jnp.zeros((_H1P, _H2P), jnp.float32).at[:_H1, :_H2].set(p["w2"])
    b2p = jnp.zeros((1, _H2P), jnp.float32).at[:, :_H2].set(p["b2"])
    w5p = jnp.zeros((_H1P, _H2P), jnp.float32).at[:_H1, :_H2].set(p["w5"])
    b5p = jnp.zeros((1, _H2P), jnp.float32).at[:, :_H2].set(p["b5"])

    # Layer 3 / 6 as padded row vectors for the off-MXU reduce.
    w3r = jnp.zeros((1, _H2P), jnp.float32).at[0, :_H2].set(p["w3"][:, 0])
    w6r = jnp.zeros((1, _H2P), jnp.float32).at[0, :_H2].set(p["w6"][:, 0])
    b36 = jnp.zeros((1, _OUTP), jnp.float32)
    b36 = b36.at[0, 0].set(p["b3"][0, 0]).at[0, 1].set(p["b6"][0, 0])

    c = compute_dtype
    return dict(
        w14=w14.astype(c), b14=b14.astype(c),
        w2=w2p.astype(c), b2=b2p.astype(c),
        w5=w5p.astype(c), b5=b5p.astype(c),
        w3=w3r.astype(c), w6=w6r.astype(c),
        b36=b36,                                   # stays f32
    )


# --------------------------------------------------------------------------
# Wrapper
# --------------------------------------------------------------------------
def critic_forward(state, action, packed, *, batch_tile=2048):
    """Pallas Critic.forward. Returns (q1, q2), each (B, 1) float32."""
    B, S = state.shape
    A = action.shape[1]
    in_dim = S + A

    # One cheap wrapper-side concat (~B*(S+A)*4 bytes) so layer 1 is a single
    # MXU matmul in the kernel.
    sa = jnp.concatenate([state, action], axis=1)

    # Tile choice: ~ceil(B/2) so the "parallel" batch axis gives >=2 grid steps
    # whenever B allows it (both v7x TensorCores busy), capped at `batch_tile`
    # (default 2048, sized for v7x's 64 MiB VMEM; v5e/v6e tolerate more).
    half = _round_up(max(1, (B + 1) // 2), 8)
    tb = max(8, min(_round_up(batch_tile, 8), half, _round_up(B, 8)))
    grid = (pl.cdiv(B, tb),)

    weights = [packed[k] for k in _PACKED_KEYS]

    in_specs = [
        pl.BlockSpec((tb, in_dim), lambda i: (i, 0)),     # concatenated input tile
    ] + [
        # Weights/biases: constant block index -> stay resident in VMEM.
        pl.BlockSpec(w.shape, lambda i: (0, 0)) for w in weights
    ]
    out_spec = pl.BlockSpec((tb, _OUTP), lambda i: (i, 0))

    # Advisory cost for the XLA scheduler (original, unpadded arithmetic).
    flops = 2 * B * (in_dim * 2 * _H1 + 2 * _H1 * _H2 + 2 * _H2)
    bytes_accessed = (
        int(sa.size) * sa.dtype.itemsize
        + sum(int(w.size) * w.dtype.itemsize for w in weights)
        + B * _OUTP * 4
    )

    out = pl.pallas_call(
        _critic_kernel,
        out_shape=jax.ShapeDtypeStruct((B, _OUTP), jnp.float32),
        grid=grid,
        in_specs=in_specs,
        out_specs=out_spec,
        compiler_params=pltpu.CompilerParams(
            dimension_semantics=("parallel",),
            vmem_limit_bytes=48 * 1024 * 1024),
        cost_estimate=pl.CostEstimate(
            flops=flops, transcendentals=0, bytes_accessed=bytes_accessed),
    )(sa, *weights)

    return out[:, 0:1], out[:, 1:2]


# --------------------------------------------------------------------------
# Pure-JAX reference (unpadded, f32)
# --------------------------------------------------------------------------
def critic_forward_ref(state, action, p):
    sa = jnp.concatenate([state, action], axis=1)
    h = jnp.maximum(sa @ p["w1"] + p["b1"], 0.0)
    h = jnp.maximum(h @ p["w2"] + p["b2"], 0.0)
    q1 = h @ p["w3"] + p["b3"]
    g = jnp.maximum(sa @ p["w4"] + p["b4"], 0.0)
    g = jnp.maximum(g @ p["w5"] + p["b5"], 0.0)
    q2 = g @ p["w6"] + p["b6"]
    return q1, q2


if __name__ == "__main__":
    state_dim, action_dim, batch = 16, 8, 8

    key = jax.random.PRNGKey(0)
    k_params, k_state, k_action = jax.random.split(key, 3)

    params = init_critic_params(k_params, state_dim, action_dim)
    state = jax.random.normal(k_state, (batch, state_dim), jnp.float32)
    action = jax.random.normal(k_action, (batch, action_dim), jnp.float32)

    q1_ref, q2_ref = critic_forward_ref(state, action, params)

    # ---- exact-semantics path: f32 compute, tight tolerance ----
    packed_f32 = pack_critic_params(params, state_dim, action_dim,
                                    compute_dtype=jnp.float32)
    q1, q2 = critic_forward(state, action, packed_f32)
    q1 = jax.block_until_ready(q1)
    q2 = jax.block_until_ready(q2)
    assert q1.shape == (batch, 1) and q2.shape == (batch, 1)
    assert jnp.allclose(q1, q1_ref, atol=1e-4, rtol=1e-4)
    assert jnp.allclose(q2, q2_ref, atol=1e-4, rtol=1e-4)

    # ---- fast path: bf16 MXU + bf16 epilogue, f32 accumulation ----
    packed_bf16 = pack_critic_params(params, state_dim, action_dim,
                                     compute_dtype=jnp.bfloat16)
    q1b, q2b = critic_forward(state, action, packed_bf16)
    q1b = jax.block_until_ready(q1b)
    q2b = jax.block_until_ready(q2b)
    assert jnp.allclose(q1b, q1_ref, atol=5e-2, rtol=5e-2)
    assert jnp.allclose(q2b, q2_ref, atol=5e-2, rtol=5e-2)

    # ---- multi-step grid sanity check (B > tile -> 3 grid steps) ----
    big_b = 24
    ks, ka = jax.random.split(jax.random.PRNGKey(1))
    state_big = jax.random.normal(ks, (big_b, state_dim), jnp.float32)
    action_big = jax.random.normal(ka, (big_b, action_dim), jnp.float32)
    q1g, q2g = critic_forward(state_big, action_big, packed_f32, batch_tile=8)
    q1g = jax.block_until_ready(q1g)
    q2g = jax.block_until_ready(q2g)
    q1g_ref, q2g_ref = critic_forward_ref(state_big, action_big, params)
    assert jnp.allclose(q1g, q1g_ref, atol=1e-4, rtol=1e-4)
    assert jnp.allclose(q2g, q2g_ref, atol=1e-4, rtol=1e-4)

    print("KERNEL_OK")
</pallas_src>

<mosaic_0001>
module attributes {stable_mosaic.version = 11 : i64} {
  func.func @_critic_kernel(%arg0: i32, %arg1: memref<8x24xf32, #tpu.memory_space<vmem>>, %arg2: memref<24x1024xf32, #tpu.memory_space<vmem>>, %arg3: memref<1x1024xf32, #tpu.memory_space<vmem>>, %arg4: memref<512x384xf32, #tpu.memory_space<vmem>>, %arg5: memref<1x384xf32, #tpu.memory_space<vmem>>, %arg6: memref<512x384xf32, #tpu.memory_space<vmem>>, %arg7: memref<1x384xf32, #tpu.memory_space<vmem>>, %arg8: memref<1x384xf32, #tpu.memory_space<vmem>>, %arg9: memref<1x384xf32, #tpu.memory_space<vmem>>, %arg10: memref<1x8xf32, #tpu.memory_space<vmem>>, %arg11: memref<8x8xf32, #tpu.memory_space<vmem>>) attributes {dimension_semantics = [#tpu.dimension_semantics<parallel>], iteration_bounds = array<i64: 1>, scalar_prefetch = 0 : i64, scratch_operands = 0 : i64, tpu.core_type = #tpu.core_type<tc>, window_params = [{transform_indices = @transform_0, window_bounds = array<i64: 8, 24>}, {pipeline_mode = #tpu.pipeline_mode<synchronous>, transform_indices = @transform_1, window_bounds = array<i64: 24, 1024>}, {pipeline_mode = #tpu.pipeline_mode<synchronous>, transform_indices = @transform_2, window_bounds = array<i64: 1, 1024>}, {pipeline_mode = #tpu.pipeline_mode<synchronous>, transform_indices = @transform_3, window_bounds = array<i64: 512, 384>}, {pipeline_mode = #tpu.pipeline_mode<synchronous>, transform_indices = @transform_4, window_bounds = array<i64: 1, 384>}, {pipeline_mode = #tpu.pipeline_mode<synchronous>, transform_indices = @transform_5, window_bounds = array<i64: 512, 384>}, {pipeline_mode = #tpu.pipeline_mode<synchronous>, transform_indices = @transform_6, window_bounds = array<i64: 1, 384>}, {pipeline_mode = #tpu.pipeline_mode<synchronous>, transform_indices = @transform_7, window_bounds = array<i64: 1, 384>}, {pipeline_mode = #tpu.pipeline_mode<synchronous>, transform_indices = @transform_8, window_bounds = array<i64: 1, 384>}, {pipeline_mode = #tpu.pipeline_mode<synchronous>, transform_indices = @transform_9, window_bounds = array<i64: 1, 8>}, {transform_indices = @transform_10, window_bounds = array<i64: 8, 8>}]} {
    %c0 = arith.constant 0 : index
    %c0_0 = arith.constant 0 : index
    %0 = vector.load %arg1[%c0, %c0_0] : memref<8x24xf32, #tpu.memory_space<vmem>>, vector<8x24xf32>
    %c0_1 = arith.constant 0 : index
    %c0_2 = arith.constant 0 : index
    %1 = vector.load %arg2[%c0_1, %c0_2] : memref<24x1024xf32, #tpu.memory_space<vmem>>, vector<24x1024xf32>
    %cst = arith.constant dense<0.000000e+00> : vector<8x1024xf32>
    %2 = tpu.matmul %0, %1, %cst {dimension_numbers = #tpu.dot_dimension_numbers<[1], [0], [0], [1], [0, 0, 1, 1], [], []>} : vector<8x24xf32>, vector<24x1024xf32>, vector<8x1024xf32> -> vector<8x1024xf32>
    %c0_3 = arith.constant 0 : index
    %c0_4 = arith.constant 0 : index
    %3 = vector.load %arg3[%c0_3, %c0_4] : memref<1x1024xf32, #tpu.memory_space<vmem>>, vector<1x1024xf32>
    %4 = vector.broadcast %3 : vector<1x1024xf32> to vector<8x1024xf32>
    %5 = arith.addf %2, %4 : vector<8x1024xf32>
    %cst_5 = arith.constant 0.000000e+00 : f32
    %6 = vector.broadcast %cst_5 : f32 to vector<8x1024xf32>
    %7 = arith.maximumf %5, %6 : vector<8x1024xf32>
    %8 = vector.extract_strided_slice %7 {offsets = [0, 0], sizes = [8, 512], strides = [1, 1]} : vector<8x1024xf32> to vector<8x512xf32>
    %9 = vector.extract_strided_slice %7 {offsets = [0, 512], sizes = [8, 512], strides = [1, 1]} : vector<8x1024xf32> to vector<8x512xf32>
    %c0_6 = arith.constant 0 : index
    %c0_7 = arith.constant 0 : index
    %10 = vector.load %arg4[%c0_6, %c0_7] : memref<512x384xf32, #tpu.memory_space<vmem>>, vector<512x384xf32>
    %cst_8 = arith.constant dense<0.000000e+00> : vector<8x384xf32>
    %11 = tpu.matmul %8, %10, %cst_8 {dimension_numbers = #tpu.dot_dimension_numbers<[1], [0], [0], [1], [0, 0, 1, 1], [], []>} : vector<8x512xf32>, vector<512x384xf32>, vector<8x384xf32> -> vector<8x384xf32>
    %c0_9 = arith.constant 0 : index
    %c0_10 = arith.constant 0 : index
    %12 = vector.load %arg5[%c0_9, %c0_10] : memref<1x384xf32, #tpu.memory_space<vmem>>, vector<1x384xf32>
    %13 = vector.broadcast %12 : vector<1x384xf32> to vector<8x384xf32>
    %14 = arith.addf %11, %13 : vector<8x384xf32>
    %cst_11 = arith.constant 0.000000e+00 : f32
    %15 = vector.broadcast %cst_11 : f32 to vector<8x384xf32>
    %16 = arith.maximumf %14, %15 : vector<8x384xf32>
    %c0_12 = arith.constant 0 : index
    %c0_13 = arith.constant 0 : index
    %17 = vector.load %arg6[%c0_12, %c0_13] : memref<512x384xf32, #tpu.memory_space<vmem>>, vector<512x384xf32>
    %cst_14 = arith.constant dense<0.000000e+00> : vector<8x384xf32>
    %18 = tpu.matmul %9, %17, %cst_14 {dimension_numbers = #tpu.dot_dimension_numbers<[1], [0], [0], [1], [0, 0, 1, 1], [], []>} : vector<8x512xf32>, vector<512x384xf32>, vector<8x384xf32> -> vector<8x384xf32>
    %c0_15 = arith.constant 0 : index
    %c0_16 = arith.constant 0 : index
    %19 = vector.load %arg7[%c0_15, %c0_16] : memref<1x384xf32, #tpu.memory_space<vmem>>, vector<1x384xf32>
    %20 = vector.broadcast %19 : vector<1x384xf32> to vector<8x384xf32>
    %21 = arith.addf %18, %20 : vector<8x384xf32>
    %cst_17 = arith.constant 0.000000e+00 : f32
    %22 = vector.broadcast %cst_17 : f32 to vector<8x384xf32>
    %23 = arith.maximumf %21, %22 : vector<8x384xf32>
    %c0_18 = arith.constant 0 : index
    %c0_19 = arith.constant 0 : index
    %24 = vector.load %arg8[%c0_18, %c0_19] : memref<1x384xf32, #tpu.memory_space<vmem>>, vector<1x384xf32>
    %25 = vector.broadcast %24 : vector<1x384xf32> to vector<8x384xf32>
    %26 = arith.mulf %16, %25 : vector<8x384xf32>
    %cst_20 = arith.constant dense<0.000000e+00> : vector<8xf32>
    %27 = vector.multi_reduction <add>, %26, %cst_20 [1] : vector<8x384xf32> to vector<8xf32>
    %28 = vector.shape_cast %27 : vector<8xf32> to vector<8x1xf32>
    %c0_21 = arith.constant 0 : index
    %c0_22 = arith.constant 0 : index
    %29 = vector.load %arg9[%c0_21, %c0_22] : memref<1x384xf32, #tpu.memory_space<vmem>>, vector<1x384xf32>
    %30 = vector.broadcast %29 : vector<1x384xf32> to vector<8x384xf32>
    %31 = arith.mulf %23, %30 : vector<8x384xf32>
    %cst_23 = arith.constant dense<0.000000e+00> : vector<8xf32>
    %32 = vector.multi_reduction <add>, %31, %cst_23 [1] : vector<8x384xf32> to vector<8xf32>
    %33 = vector.shape_cast %32 : vector<8xf32> to vector<8x1xf32>
    %34 = tpu.iota {dimensions = array<i32: 1>} : vector<8x8xi32>
    %c0_i32 = arith.constant 0 : i32
    %35 = vector.broadcast %c0_i32 : i32 to vector<8x8xi32>
    %36 = arith.cmpi eq, %34, %35 : vector<8x8xi32>
    %c1_i32 = arith.constant 1 : i32
    %37 = vector.broadcast %c1_i32 : i32 to vector<8x8xi32>
    %38 = arith.cmpi eq, %34, %37 : vector<8x8xi32>
    %cst_24 = arith.constant 0.000000e+00 : f32
    %39 = vector.shape_cast %33 : vector<8x1xf32> to vector<8x1xf32>
    %40 = vector.broadcast %39 : vector<8x1xf32> to vector<8x8xf32>
    %41 = vector.broadcast %cst_24 : f32 to vector<8x8xf32>
    %42 = arith.select %38, %40, %41 : vector<8x8xi1>, vector<8x8xf32>
    %43 = vector.shape_cast %28 : vector<8x1xf32> to vector<8x1xf32>
    %44 = vector.broadcast %43 : vector<8x1xf32> to vector<8x8xf32>
    %45 = arith.select %36, %44, %42 : vector<8x8xi1>, vector<8x8xf32>
    %c0_25 = arith.constant 0 : index
    %c0_26 = arith.constant 0 : index
    %46 = vector.load %arg10[%c0_25, %c0_26] : memref<1x8xf32, #tpu.memory_space<vmem>>, vector<1x8xf32>
    %47 = vector.broadcast %46 : vector<1x8xf32> to vector<8x8xf32>
    %48 = arith.addf %45, %47 : vector<8x8xf32>
    %c0_27 = arith.constant 0 : index
    %c0_28 = arith.constant 0 : index
    %49 = vector.load %arg11[%c0_27, %c0_28] : memref<8x8xf32, #tpu.memory_space<vmem>>, vector<8x8xf32>
    tpu.vector_store %arg11[%c0_27, %c0_28], %48 {strides = array<i32>} : memref<8x8xf32, #tpu.memory_space<vmem>>, vector<8x8xf32>,
    return
  }
  func.func @transform_0(%arg0: i32) -> (i32, i32) {
    %c0_i32 = arith.constant 0 : i32
    %c0_i32_0 = arith.constant 0 : i32
    return %arg0, %c0_i32 : i32, i32
  }
  func.func @transform_1(%arg0: i32) -> (i32, i32) {
    %c0_i32 = arith.constant 0 : i32
    %c0_i32_0 = arith.constant 0 : i32
    %c0_i32_1 = arith.constant 0 : i32
    return %c0_i32, %c0_i32_0 : i32, i32
  }
  func.func @transform_2(%arg0: i32) -> (i32, i32) {
    %c0_i32 = arith.constant 0 : i32
    %c0_i32_0 = arith.constant 0 : i32
    %c0_i32_1 = arith.constant 0 : i32
    return %c0_i32, %c0_i32_0 : i32, i32
  }
  func.func @transform_3(%arg0: i32) -> (i32, i32) {
    %c0_i32 = arith.constant 0 : i32
    %c0_i32_0 = arith.constant 0 : i32
    %c0_i32_1 = arith.constant 0 : i32
    return %c0_i32, %c0_i32_0 : i32, i32
  }
  func.func @transform_4(%arg0: i32) -> (i32, i32) {
    %c0_i32 = arith.constant 0 : i32
    %c0_i32_0 = arith.constant 0 : i32
    %c0_i32_1 = arith.constant 0 : i32
    return %c0_i32, %c0_i32_0 : i32, i32
  }
  func.func @transform_5(%arg0: i32) -> (i32, i32) {
    %c0_i32 = arith.constant 0 : i32
    %c0_i32_0 = arith.constant 0 : i32
    %c0_i32_1 = arith.constant 0 : i32
    return %c0_i32, %c0_i32_0 : i32, i32
  }
  func.func @transform_6(%arg0: i32) -> (i32, i32) {
    %c0_i32 = arith.constant 0 : i32
    %c0_i32_0 = arith.constant 0 : i32
    %c0_i32_1 = arith.constant 0 : i32
    return %c0_i32, %c0_i32_0 : i32, i32
  }
  func.func @transform_7(%arg0: i32) -> (i32, i32) {
    %c0_i32 = arith.constant 0 : i32
    %c0_i32_0 = arith.constant 0 : i32
    %c0_i32_1 = arith.constant 0 : i32
    return %c0_i32, %c0_i32_0 : i32, i32
  }
  func.func @transform_8(%arg0: i32) -> (i32, i32) {
    %c0_i32 = arith.constant 0 : i32
    %c0_i32_0 = arith.constant 0 : i32
    %c0_i32_1 = arith.constant 0 : i32
    return %c0_i32, %c0_i32_0 : i32, i32
  }
  func.func @transform_9(%arg0: i32) -> (i32, i32) {
    %c0_i32 = arith.constant 0 : i32
    %c0_i32_0 = arith.constant 0 : i32
    %c0_i32_1 = arith.constant 0 : i32
    return %c0_i32, %c0_i32_0 : i32, i32
  }
  func.func @transform_10(%arg0: i32) -> (i32, i32) {
    %c0_i32 = arith.constant 0 : i32
    %c0_i32_0 = arith.constant 0 : i32
    return %arg0, %c0_i32 : i32, i32
  }
}

</mosaic_0001>

<llo_original>
// kernel: tpu_custom_call.1
$region0: #{tpu_custom_call.1}
  #allocation0 [shape = 'u32[]', space=smem, size = 0x4, offset = 0x4, fixed_abs, tag = 'smem constant byte address 0x4 - core index']
  #allocation1 [shape = 'u32[144,128]{1,0:T(1,128)}', space=vmem, size = 0x12000, scoped, tag = 'internal scratch']
  %s0 = inlined_call_operand.hbm [shape: f32[8,24], index: 0, kind: input, shape index: {}]
  %s1 = inlined_call_operand.hbm [shape: f32[24,1024], index: 1, kind: input, shape index: {}]
  %s2 = inlined_call_operand.hbm [shape: f32[1,1024], index: 2, kind: input, shape index: {}]
  %s3 = inlined_call_operand.hbm [shape: f32[512,384], index: 3, kind: input, shape index: {}]
  %s4 = inlined_call_operand.vmem [shape: f32[1,384], index: 4, kind: input, shape index: {}]
  %s5 = inlined_call_operand.hbm [shape: f32[512,384], index: 5, kind: input, shape index: {}]
  %s6 = inlined_call_operand.vmem [shape: f32[1,384], index: 6, kind: input, shape index: {}]
  %s7 = inlined_call_operand.vmem [shape: f32[1,384], index: 7, kind: input, shape index: {}]
  %s8 = inlined_call_operand.vmem [shape: f32[1,384], index: 8, kind: input, shape index: {}]
  %s9 = inlined_call_operand.vmem [shape: f32[1,8], index: 9, kind: input, shape index: {}]
  %s10 = inlined_call_operand.hbm [shape: f32[8,8], index: 10, kind: output, shape index: {}]
  %s11 = sld [smem:[#allocation0]]
  $region70: #{tpu_custom_call.1} parent=0
    _
  %s13 = ssub.s32 1, %s11
  %s14 = scalar_select 0, %s13, %s11
  $region1: #{tpu_custom_call.1} parent=0
    #allocation2 [shape = 'u8[4096]{0}', space=vmem, size = 0x1000, scoped, tag = 'input window, operand 0, single buffered']
    #allocation3 [shape = 's32[1]{0}', space=sflag, size = 0x4, scoped, tag = 'scoped memory for tpu_custom_call.1']
    #allocation4 [shape = 's32[1]{0}', space=sflag, size = 0x4, scoped, tag = 'scoped memory for tpu_custom_call.1']
    #allocation5 [shape = 'u8[98304]{0}', space=vmem, size = 0x18000, scoped, tag = 'input window, operand 1, single buffered']
    #allocation6 [shape = 's32[1]{0}', space=sflag, size = 0x4, scoped, tag = 'scoped memory for tpu_custom_call.1']
    #allocation7 [shape = 'u8[4096]{0}', space=vmem, size = 0x1000, scoped, tag = 'input window, operand 2, single buffered']
    #allocation8 [shape = 'u8[786432]{0}', space=vmem, size = 0xc0000, scoped, tag = 'input window, operand 3, single buffered']
    #allocation9 [shape = 's32[1]{0}', space=sflag, size = 0x4, scoped, tag = 'scoped memory for tpu_custom_call.1']
    #allocation10 [shape = 'u8[786432]{0}', space=vmem, size = 0xc0000, scoped, tag = 'input window, operand 5, single buffered']
    #allocation11 [shape = 'u8[4096]{0}', space=vmem, size = 0x1000, scoped, tag = 'output window, operand 0, single buffered']
    %15 = vsyncpa [#allocation3], 0
    %16 = vsyncpa [#allocation6], 0
    %17 = vsyncpa [#allocation9], 0
    %18 = vsyncpa [#allocation4], 0
    // Predicated region
    $region2: #{tpu_custom_call.1} parent=1 // pred_check
      _
    $region3: #{tpu_custom_call.1} parent=1 // pred_check_branch
      %20 = sbr.rel (0) target = $region5
    $region4: #{tpu_custom_call.1} parent=1 // pred_region
      %s22 = ssub.s32 128, 128
      %23 = vsyncadd [#allocation3], %s22
      %s25 = sshll.u32 [#allocation2], 4
      %s26 = int_to_ptr.vmem [resolvable:$true] %s25
      %28 = dma.hbm_to_vmem [thread:$0]  %s0, 128, %s26, [#allocation3]
    $region5: #{tpu_custom_call.1} parent=1 // pred_fallthru
      _
    // Predicated region
    $region6: #{tpu_custom_call.1} parent=1 // pred_check
      _
    $region7: #{tpu_custom_call.1} parent=1 // pred_check_branch
      %30 = sbr.rel (0) target = $region9
    $region8: #{tpu_custom_call.1} parent=1 // pred_region
      %s32 = ssub.s32 3072, 3072
      %33 = vsyncadd [#allocation6], %s32
      %s34 = sshll.u32 [#allocation5], 4
      %s35 = int_to_ptr.vmem [resolvable:$true] %s34
      %40 = dma.hbm_to_vmem [thread:$0]  %s1, 3072, %s35, [#allocation6], 1024, 1024, 64
    $region9: #{tpu_custom_call.1} parent=1 // pred_fallthru
      _
    // Predicated region
    $region10: #{tpu_custom_call.1} parent=1 // pred_check
      _
    $region11: #{tpu_custom_call.1} parent=1 // pred_check_branch
      %42 = sbr.rel (0) target = $region13
    $region12: #{tpu_custom_call.1} parent=1 // pred_region
      %s44 = ssub.s32 128, 128
      %45 = vsyncadd [#allocation6], %s44
      %s47 = sshll.u32 [#allocation7], 4
      %s48 = int_to_ptr.vmem [resolvable:$true] %s47
      %50 = dma.hbm_to_vmem [thread:$0]  %s2, 128, %s48, [#allocation6]
    $region13: #{tpu_custom_call.1} parent=1 // pred_fallthru
      _
    // Predicated region
    $region14: #{tpu_custom_call.1} parent=1 // pred_check
      _
    $region15: #{tpu_custom_call.1} parent=1 // pred_check_branch
      %52 = sbr.rel (0) target = $region17
    $region16: #{tpu_custom_call.1} parent=1 // pred_region
      %s54 = ssub.s32 24576, 24576
      %55 = vsyncadd [#allocation9], %s54
      %s56 = sshll.u32 [#allocation8], 4
      %s57 = int_to_ptr.vmem [resolvable:$true] %s56
      %62 = dma.hbm_to_vmem [thread:$0]  %s3, 24576, %s57, [#allocation9], 384, 384, 24
    $region17: #{tpu_custom_call.1} parent=1 // pred_fallthru
      _
    // Predicated region
    $region18: #{tpu_custom_call.1} parent=1 // pred_check
      _
    $region19: #{tpu_custom_call.1} parent=1 // pred_check_branch
      %64 = sbr.rel (0) target = $region21
    $region20: #{tpu_custom_call.1} parent=1 // pred_region
      _
    $region21: #{tpu_custom_call.1} parent=1 // pred_fallthru
      _
    // Predicated region
    $region22: #{tpu_custom_call.1} parent=1 // pred_check
      _
    $region23: #{tpu_custom_call.1} parent=1 // pred_check_branch
      %66 = sbr.rel (0) target = $region25
    $region24: #{tpu_custom_call.1} parent=1 // pred_region
      %s68 = ssub.s32 24576, 24576
      %69 = vsyncadd [#allocation9], %s68
      %s70 = sshll.u32 [#allocation10], 4
      %s71 = int_to_ptr.vmem [resolvable:$true] %s70
      %76 = dma.hbm_to_vmem [thread:$0]  %s5, 24576, %s71, [#allocation9], 384, 384, 24
    $region25: #{tpu_custom_call.1} parent=1 // pred_fallthru
      _
    // Predicated region
    $region26: #{tpu_custom_call.1} parent=1 // pred_check
      _
    $region27: #{tpu_custom_call.1} parent=1 // pred_check_branch
      %78 = sbr.rel (0) target = $region29
    $region28: #{tpu_custom_call.1} parent=1 // pred_region
      _
    $region29: #{tpu_custom_call.1} parent=1 // pred_fallthru
      _
    // Predicated region
    $region30: #{tpu_custom_call.1} parent=1 // pred_check
      _
    $region31: #{tpu_custom_call.1} parent=1 // pred_check_branch
      %80 = sbr.rel (0) target = $region33
    $region32: #{tpu_custom_call.1} parent=1 // pred_region
      _
    $region33: #{tpu_custom_call.1} parent=1 // pred_fallthru
      _
    // Predicated region
    $region34: #{tpu_custom_call.1} parent=1 // pred_check
      _
    $region35: #{tpu_custom_call.1} parent=1 // pred_check_branch
      %82 = sbr.rel (0) target = $region37
    $region36: #{tpu_custom_call.1} parent=1 // pred_region
      _
    $region37: #{tpu_custom_call.1} parent=1 // pred_fallthru
      _
    // Predicated region
    $region38: #{tpu_custom_call.1} parent=1 // pred_check
      _
    $region39: #{tpu_custom_call.1} parent=1 // pred_check_branch
      %84 = sbr.rel (0) target = $region41
    $region40: #{tpu_custom_call.1} parent=1 // pred_region
      _
    $region41: #{tpu_custom_call.1} parent=1 // pred_fallthru
      _
    // Predicated region
    $region42: #{tpu_custom_call.1} parent=1 // pred_check
      _
    $region43: #{tpu_custom_call.1} parent=1 // pred_check_branch
      %86 = sbr.rel (0) target = $region45
    $region44: #{tpu_custom_call.1} parent=1 // pred_region
      %87 = dma.done [#allocation3], 128
    $region45: #{tpu_custom_call.1} parent=1 // pred_fallthru
      _
    // Predicated region
    $region46: #{tpu_custom_call.1} parent=1 // pred_check
      _
    $region47: #{tpu_custom_call.1} parent=1 // pred_check_branch
      %89 = sbr.rel (0) target = $region49
    $region48: #{tpu_custom_call.1} parent=1 // pred_region
      %90 = dma.done [#allocation6], 3072
    $region49: #{tpu_custom_call.1} parent=1 // pred_fallthru
      _
    // Predicated region
    $region50: #{tpu_custom_call.1} parent=1 // pred_check
      _
    $region51: #{tpu_custom_call.1} parent=1 // pred_check_branch
      %92 = sbr.rel (0) target = $region53
    $region52: #{tpu_custom_call.1} parent=1 // pred_region
      %93 = dma.done [#allocation6], 128
    $region53: #{tpu_custom_call.1} parent=1 // pred_fallthru
      _
    // Predicated region
    $region54: #{tpu_custom_call.1} parent=1 // pred_check
      _
    $region55: #{tpu_custom_call.1} parent=1 // pred_check_branch
      %95 = sbr.rel (0) target = $region57
    $region56: #{tpu_custom_call.1} parent=1 // pred_region
      %96 = dma.done [#allocation9], 24576
    $region57: #{tpu_custom_call.1} parent=1 // pred_fallthru
      _
    // Predicated region
    $region58: #{tpu_custom_call.1} parent=1 // pred_check
      _
    $region59: #{tpu_custom_call.1} parent=1 // pred_check_branch
      %98 = sbr.rel (0) target = $region61
    $region60: #{tpu_custom_call.1} parent=1 // pred_region
      %99 = dma.done [#allocation9], 24576
    $region61: #{tpu_custom_call.1} parent=1 // pred_fallthru
      _
    %v100 = vld [vmem:[#allocation2] sm:$0xff]
    %v101 = vld [vmem:[#allocation5] sm:$0xff]
    %v102 = vld [vmem:[#allocation5 + $0x8] sm:$0xff]
    %v103 = vld [vmem:[#allocation5 + $0x10] sm:$0xff]
    %v104 = vld [vmem:[#allocation5 + $0x18] sm:$0xff]
    %v105 = vld [vmem:[#allocation5 + $0x20] sm:$0xff]
    %v106 = vld [vmem:[#allocation5 + $0x28] sm:$0xff]
    %v107 = vld [vmem:[#allocation5 + $0x30] sm:$0xff]
    %v108 = vld [vmem:[#allocation5 + $0x38] sm:$0xff]
    %v109 = vld [vmem:[#allocation5 + $0x40] sm:$0xff]
    %v110 = vld [vmem:[#allocation5 + $0x48] sm:$0xff]
    %v111 = vld [vmem:[#allocation5 + $0x50] sm:$0xff]
    %v112 = vld [vmem:[#allocation5 + $0x58] sm:$0xff]
    %v113 = vld [vmem:[#allocation5 + $0x60] sm:$0xff]
    %v114 = vld [vmem:[#allocation5 + $0x68] sm:$0xff]
    %v115 = vld [vmem:[#allocation5 + $0x70] sm:$0xff]
    %v116 = vld [vmem:[#allocation5 + $0x78] sm:$0xff]
    %v117 = vld [vmem:[#allocation5 + $0x80] sm:$0xff]
    %v118 = vld [vmem:[#allocation5 + $0x88] sm:$0xff]
    %v119 = vld [vmem:[#allocation5 + $0x90] sm:$0xff]
    %v120 = vld [vmem:[#allocation5 + $0x98] sm:$0xff]
    %v121 = vld [vmem:[#allocation5 + $0xa0] sm:$0xff]
    %v122 = vld [vmem:[#allocation5 + $0xa8] sm:$0xff]
    %v123 = vld [vmem:[#allocation5 + $0xb0] sm:$0xff]
    %v124 = vld [vmem:[#allocation5 + $0xb8] sm:$0xff]
    %v125 = vld [vmem:[#allocation7] sm:$0xff]
    %v127 = vlaneseq
    %v128 = vshrl.u32 %v127, 7
    %v129 = vsub.s32 0, %v128
    %v130 = vrot.slane %v125, %v129
    %v131 = vlaneseq
    %v132 = vshrl.u32 %v131, 7
    %v133 = vsub.s32 1, %v132
    %v134 = vrot.slane %v125, %v133
    %v135 = vlaneseq
    %v136 = vshrl.u32 %v135, 7
    %v137 = vsub.s32 2, %v136
    %v138 = vrot.slane %v125, %v137
    %v139 = vlaneseq
    %v140 = vshrl.u32 %v139, 7
    %v141 = vsub.s32 3, %v140
    %v142 = vrot.slane %v125, %v141
    %v143 = vlaneseq
    %v144 = vshrl.u32 %v143, 7
    %v145 = vsub.s32 4, %v144
    %v146 = vrot.slane %v125, %v145
    %v147 = vlaneseq
    %v148 = vshrl.u32 %v147, 7
    %v149 = vsub.s32 5, %v148
    %v150 = vrot.slane %v125, %v149
    %v151 = vlaneseq
    %v152 = vshrl.u32 %v151, 7
    %v153 = vsub.s32 6, %v152
    %v154 = vrot.slane %v125, %v153
    %v155 = vlaneseq
    %v156 = vshrl.u32 %v155, 7
    %v157 = vsub.s32 7, %v156
    %v158 = vrot.slane %v125, %v157
    %vm167 = vcmask 195584
    %v169 = vsel %vm167, %v100, 0
    %171 = vmatprep.subr.mxu0 0.0
    %172 = vmatpush1.msra.mxu0 0.0
    %173 = vmatprep.subr.mxu0 0.0
    %174 = vmatpush1.msra.mxu0 0.0
    %175 = vmatprep.subr.mxu0 0.0
    %176 = vmatpush1.msra.mxu0 0.0
    %177 = vmatprep.subr.mxu0 0.0
    %178 = vmatpush1.msra.mxu0 0.0
    %179 = vmatprep.subr.mxu0 0.0
    %180 = vmatpush1.msra.mxu0 0.0
    %181 = vmatprep.subr.mxu0 0.0
    %182 = vmatpush1.msra.mxu0 0.0
    %183 = vmatprep.subr.mxu0 0.0
    %184 = vmatpush1.msra.mxu0 0.0
    %185 = vmatprep.subr.mxu0 0.0
    %186 = vmatpush1.msra.mxu0 0.0
    %187 = vmatprep.subr.mxu0 0.0
    %188 = vmatpush1.msra.mxu0 0.0
    %189 = vmatprep.subr.mxu0 0.0
    %190 = vmatpush1.msra.mxu0 0.0
    %191 = vmatprep.subr.mxu0 0.0
    %192 = vmatpush1.msra.mxu0 0.0
    %193 = vmatprep.subr.mxu0 0.0
    %194 = vmatpush1.msra.mxu0 0.0
    %195 = vmatprep.subr.mxu0 0.0
    %196 = vmatpush1.msra.mxu0 0.0
    %197 = vmatprep.subr.mxu0 %v118
    %198 = vmatpush1.msra.mxu0 %v117
    %199 = vmatprep.subr.mxu0 %v110
    %200 = vmatpush1.msra.mxu0 %v109
    %201 = vmatprep.subr.mxu0 %v102
    %202 = vmatpush1.msra.mxu0 %v101
    %203 = vmatprep.subr.mxu0 0.0
    %204 = vmatpush2.msra.mxu0 0.0
    %205 = vmatprep.subr.mxu0 0.0
    %206 = vmatpush2.msra.mxu0 0.0
    %207 = vmatprep.subr.mxu0 0.0
    %208 = vmatpush2.msra.mxu0 0.0
    %209 = vmatprep.subr.mxu0 0.0
    %210 = vmatpush2.msra.mxu0 0.0
    %211 = vmatprep.subr.mxu0 0.0
    %212 = vmatpush2.msra.mxu0 0.0
    %213 = vmatprep.subr.mxu0 0.0
    %214 = vmatpush2.msra.mxu0 0.0
    %215 = vmatprep.subr.mxu0 0.0
    %216 = vmatpush2.msra.mxu0 0.0
    %217 = vmatprep.subr.mxu0 0.0
    %218 = vmatpush2.msra.mxu0 0.0
    %219 = vmatprep.subr.mxu0 0.0
    %220 = vmatpush2.msra.mxu0 0.0
    %221 = vmatprep.subr.mxu0 0.0
    %222 = vmatpush2.msra.mxu0 0.0
    %223 = vmatprep.subr.mxu0 0.0
    %224 = vmatpush2.msra.mxu0 0.0
    %225 = vmatprep.subr.mxu0 0.0
    %226 = vmatpush2.msra.mxu0 0.0
    %227 = vmatprep.subr.mxu0 0.0
    %228 = vmatpush2.msra.mxu0 0.0
    %229 = vmatprep.subr.mxu0 0.0
    %230 = vmatpush2.msra.mxu0 0.0
    %231 = vmatprep.subr.mxu0 0.0
    %232 = vmatpush2.msra.mxu0 0.0
    %233 = vmatprep.subr.mxu0 0.0
    %234 = vmatpush2.msra.mxu0 0.0
    %235 = vmatprep.mubr.f32.mxu0 0.0
    %236 = vmatmul.mubr.f32.gmra.mxu0 %v169
    %v237 = vpop.f32.mrf.mxu0
    %v238 = vadd.f32 %v130, %v237
    %v239 = vpop.f32.mrf.mxu0
    %v240 = vadd.f32 %v134, %v239
    %241 = vdwg.mxu0
    %242 = vmatprep.subr.mxu0 0.0
    %243 = vmatpush1.msra.mxu0 0.0
    %244 = vmatprep.subr.mxu0 0.0
    %245 = vmatpush1.msra.mxu0 0.0
    %246 = vmatprep.subr.mxu0 0.0
    %247 = vmatpush1.msra.mxu0 0.0
    %248 = vmatprep.subr.mxu0 0.0
    %249 = vmatpush1.msra.mxu0 0.0
    %250 = vmatprep.subr.mxu0 0.0
    %251 = vmatpush1.msra.mxu0 0.0
    %252 = vmatprep.subr.mxu0 0.0
    %253 = vmatpush1.msra.mxu0 0.0
    %254 = vmatprep.subr.mxu0 0.0
    %255 = vmatpush1.msra.mxu0 0.0
    %256 = vmatprep.subr.mxu0 0.0
    %257 = vmatpush1.msra.mxu0 0.0
    %258 = vmatprep.subr.mxu0 0.0
    %259 = vmatpush1.msra.mxu0 0.0
    %260 = vmatprep.subr.mxu0 0.0
    %261 = vmatpush1.msra.mxu0 0.0
    %262 = vmatprep.subr.mxu0 0.0
    %263 = vmatpush1.msra.mxu0 0.0
    %264 = vmatprep.subr.mxu0 0.0
    %265 = vmatpush1.msra.mxu0 0.0
    %266 = vmatprep.subr.mxu0 0.0
    %267 = vmatpush1.msra.mxu0 0.0
    %268 = vmatprep.subr.mxu0 %v120
    %269 = vmatpush1.msra.mxu0 %v119
    %270 = vmatprep.subr.mxu0 %v112
    %271 = vmatpush1.msra.mxu0 %v111
    %272 = vmatprep.subr.mxu0 %v104
    %273 = vmatpush1.msra.mxu0 %v103
    %274 = vmatprep.subr.mxu0 0.0
    %275 = vmatpush2.msra.mxu0 0.0
    %276 = vmatprep.subr.mxu0 0.0
    %277 = vmatpush2.msra.mxu0 0.0
    %278 = vmatprep.subr.mxu0 0.0
    %279 = vmatpush2.msra.mxu0 0.0
    %280 = vmatprep.subr.mxu0 0.0
    %281 = vmatpush2.msra.mxu0 0.0
    %282 = vmatprep.subr.mxu0 0.0
    %283 = vmatpush2.msra.mxu0 0.0
    %284 = vmatprep.subr.mxu0 0.0
    %285 = vmatpush2.msra.mxu0 0.0
    %286 = vmatprep.subr.mxu0 0.0
    %287 = vmatpush2.msra.mxu0 0.0
    %288 = vmatprep.subr.mxu0 0.0
    %289 = vmatpush2.msra.mxu0 0.0
    %290 = vmatprep.subr.mxu0 0.0
    %291 = vmatpush2.msra.mxu0 0.0
    %292 = vmatprep.subr.mxu0 0.0
    %293 = vmatpush2.msra.mxu0 0.0
    %294 = vmatprep.subr.mxu0 0.0
    %295 = vmatpush2.msra.mxu0 0.0
    %296 = vmatprep.subr.mxu0 0.0
    %297 = vmatpush2.msra.mxu0 0.0
    %298 = vmatprep.subr.mxu0 0.0
    %299 = vmatpush2.msra.mxu0 0.0
    %300 = vmatprep.subr.mxu0 0.0
    %301 = vmatpush2.msra.mxu0 0.0
    %302 = vmatprep.subr.mxu0 0.0
    %303 = vmatpush2.msra.mxu0 0.0
    %304 = vmatprep.subr.mxu0 0.0
    %305 = vmatpush2.msra.mxu0 0.0
    %306 = vmatprep.mubr.f32.mxu0 0.0
    %307 = vmatmul.mubr.f32.gmra.mxu0 %v169
    %v308 = vpop.f32.mrf.mxu0
    %v309 = vadd.f32 %v138, %v308
    %v310 = vpop.f32.mrf.mxu0
    %v311 = vadd.f32 %v142, %v310
    %312 = vdwg.mxu0
    %313 = vmatprep.subr.mxu0 0.0
    %314 = vmatpush1.msra.mxu0 0.0
    %315 = vmatprep.subr.mxu0 0.0
    %316 = vmatpush1.msra.mxu0 0.0
    %317 = vmatprep.subr.mxu0 0.0
    %318 = vmatpush1.msra.mxu0 0.0
    %319 = vmatprep.subr.mxu0 0.0
    %320 = vmatpush1.msra.mxu0 0.0
    %321 = vmatprep.subr.mxu0 0.0
    %322 = vmatpush1.msra.mxu0 0.0
    %323 = vmatprep.subr.mxu0 0.0
    %324 = vmatpush1.msra.mxu0 0.0
    %325 = vmatprep.subr.mxu0 0.0
    %326 = vmatpush1.msra.mxu0 0.0
    %327 = vmatprep.subr.mxu0 0.0
    %328 = vmatpush1.msra.mxu0 0.0
    %329 = vmatprep.subr.mxu0 0.0
    %330 = vmatpush1.msra.mxu0 0.0
    %331 = vmatprep.subr.mxu0 0.0
    %332 = vmatpush1.msra.mxu0 0.0
    %333 = vmatprep.subr.mxu0 0.0
    %334 = vmatpush1.msra.mxu0 0.0
    %335 = vmatprep.subr.mxu0 0.0
    %336 = vmatpush1.msra.mxu0 0.0
    %337 = vmatprep.subr.mxu0 0.0
    %338 = vmatpush1.msra.mxu0 0.0
    %339 = vmatprep.subr.mxu0 %v122
    %340 = vmatpush1.msra.mxu0 %v121
    %341 = vmatprep.subr.mxu0 %v114
    %342 = vmatpush1.msra.mxu0 %v113
    %343 = vmatprep.subr.mxu0 %v106
    %344 = vmatpush1.msra.mxu0 %v105
    %345 = vmatprep.subr.mxu0 0.0
    %346 = vmatpush2.msra.mxu0 0.0
    %347 = vmatprep.subr.mxu0 0.0
    %348 = vmatpush2.msra.mxu0 0.0
    %349 = vmatprep.subr.mxu0 0.0
    %350 = vmatpush2.msra.mxu0 0.0
    %351 = vmatprep.subr.mxu0 0.0
    %352 = vmatpush2.msra.mxu0 0.0
    %353 = vmatprep.subr.mxu0 0.0
    %354 = vmatpush2.msra.mxu0 0.0
    %355 = vmatprep.subr.mxu0 0.0
    %356 = vmatpush2.msra.mxu0 0.0
    %357 = vmatprep.subr.mxu0 0.0
    %358 = vmatpush2.msra.mxu0 0.0
    %359 = vmatprep.subr.mxu0 0.0
    %360 = vmatpush2.msra.mxu0 0.0
    %361 = vmatprep.subr.mxu0 0.0
    %362 = vmatpush2.msra.mxu0 0.0
    %363 = vmatprep.subr.mxu0 0.0
    %364 = vmatpush2.msra.mxu0 0.0
    %365 = vmatprep.subr.mxu0 0.0
    %366 = vmatpush2.msra.mxu0 0.0
    %367 = vmatprep.subr.mxu0 0.0
    %368 = vmatpush2.msra.mxu0 0.0
    %369 = vmatprep.subr.mxu0 0.0
    %370 = vmatpush2.msra.mxu0 0.0
    %371 = vmatprep.subr.mxu0 0.0
    %372 = vmatpush2.msra.mxu0 0.0
    %373 = vmatprep.subr.mxu0 0.0
    %374 = vmatpush2.msra.mxu0 0.0
    %375 = vmatprep.subr.mxu0 0.0
    %376 = vmatpush2.msra.mxu0 0.0
    %377 = vmatprep.mubr.f32.mxu0 0.0
    %378 = vmatmul.mubr.f32.gmra.mxu0 %v169
    %v379 = vpop.f32.mrf.mxu0
    %v380 = vadd.f32 %v146, %v379
    %v381 = vpop.f32.mrf.mxu0
    %v382 = vadd.f32 %v150, %v381
    %383 = vdwg.mxu0
    %384 = vmatprep.subr.mxu0 0.0
    %385 = vmatpush1.msra.mxu0 0.0
    %386 = vmatprep.subr.mxu0 0.0
    %387 = vmatpush1.msra.mxu0 0.0
    %388 = vmatprep.subr.mxu0 0.0
    %389 = vmatpush1.msra.mxu0 0.0
    %390 = vmatprep.subr.mxu0 0.0
    %391 = vmatpush1.msra.mxu0 0.0
    %392 = vmatprep.subr.mxu0 0.0
    %393 = vmatpush1.msra.mxu0 0.0
    %394 = vmatprep.subr.mxu0 0.0
    %395 = vmatpush1.msra.mxu0 0.0
    %396 = vmatprep.subr.mxu0 0.0
    %397 = vmatpush1.msra.mxu0 0.0
    %398 = vmatprep.subr.mxu0 0.0
    %399 = vmatpush1.msra.mxu0 0.0
    %400 = vmatprep.subr.mxu0 0.0
    %401 = vmatpush1.msra.mxu0 0.0
    %402 = vmatprep.subr.mxu0 0.0
    %403 = vmatpush1.msra.mxu0 0.0
    %404 = vmatprep.subr.mxu0 0.0
    %405 = vmatpush1.msra.mxu0 0.0
    %406 = vmatprep.subr.mxu0 0.0
    %407 = vmatpush1.msra.mxu0 0.0
    %408 = vmatprep.subr.mxu0 0.0
    %409 = vmatpush1.msra.mxu0 0.0
    %410 = vmatprep.subr.mxu0 %v124
    %411 = vmatpush1.msra.mxu0 %v123
    %412 = vmatprep.subr.mxu0 %v116
    %413 = vmatpush1.msra.mxu0 %v115
    %414 = vmatprep.subr.mxu0 %v108
    %415 = vmatpush1.msra.mxu0 %v107
    %416 = vmatprep.subr.mxu0 0.0
    %417 = vmatpush2.msra.mxu0 0.0
    %418 = vmatprep.subr.mxu0 0.0
    %419 = vmatpush2.msra.mxu0 0.0
    %420 = vmatprep.subr.mxu0 0.0
    %421 = vmatpush2.msra.mxu0 0.0
    %422 = vmatprep.subr.mxu0 0.0
    %423 = vmatpush2.msra.mxu0 0.0
    %424 = vmatprep.subr.mxu0 0.0
    %425 = vmatpush2.msra.mxu0 0.0
    %426 = vmatprep.subr.mxu0 0.0
    %427 = vmatpush2.msra.mxu0 0.0
    %428 = vmatprep.subr.mxu0 0.0
    %429 = vmatpush2.msra.mxu0 0.0
    %430 = vmatprep.subr.mxu0 0.0
    %431 = vmatpush2.msra.mxu0 0.0
    %432 = vmatprep.subr.mxu0 0.0
    %433 = vmatpush2.msra.mxu0 0.0
    %434 = vmatprep.subr.mxu0 0.0
    %435 = vmatpush2.msra.mxu0 0.0
    %436 = vmatprep.subr.mxu0 0.0
    %437 = vmatpush2.msra.mxu0 0.0
    %438 = vmatprep.subr.mxu0 0.0
    %439 = vmatpush2.msra.mxu0 0.0
    %440 = vmatprep.subr.mxu0 0.0
    %441 = vmatpush2.msra.mxu0 0.0
    %442 = vmatprep.subr.mxu0 0.0
    %443 = vmatpush2.msra.mxu0 0.0
    %444 = vmatprep.subr.mxu0 0.0
    %445 = vmatpush2.msra.mxu0 0.0
    %446 = vmatprep.subr.mxu0 0.0
    %447 = vmatpush2.msra.mxu0 0.0
    %448 = vmatprep.mubr.f32.mxu0 0.0
    %449 = vmatmul.mubr.f32.gmra.mxu0 %v169
    %v450 = vpop.f32.mrf.mxu0
    %v451 = vadd.f32 %v154, %v450
    %v452 = vpop.f32.mrf.mxu0
    %v453 = vadd.f32 %v158, %v452
    %454 = vdwg.mxu0
    %v455 = vmax.f32 %v238, 0.0
    %v456 = vmax.f32 %v240, 0.0
    %v457 = vmax.f32 %v309, 0.0
    %v458 = vmax.f32 %v311, 0.0
    %v459 = vmax.f32 %v380, 0.0
    %v460 = vmax.f32 %v382, 0.0
    %v461 = vmax.f32 %v451, 0.0
    %v462 = vmax.f32 %v453, 0.0
    %v463 = vld [vmem:[#allocation8] sm:$0xff]
    %v464 = vld [vmem:[#allocation8 + $0x8] sm:$0xff]
    %v465 = vld [vmem:[#allocation8 + $0x10] sm:$0xff]
    %v466 = vld [vmem:[#allocation8 + $0x18] sm:$0xff]
    %v467 = vld [vmem:[#allocation8 + $0x20] sm:$0xff]
    %v468 = vld [vmem:[#allocation8 + $0x28] sm:$0xff]
    %v469 = vld [vmem:[#allocation8 + $0x30] sm:$0xff]
    %v470 = vld [vmem:[#allocation8 + $0x38] sm:$0xff]
    %v471 = vld [vmem:[#allocation8 + $0x40] sm:$0xff]
    %v472 = vld [vmem:[#allocation8 + $0x48] sm:$0xff]
    %v473 = vld [vmem:[#allocation8 + $0x50] sm:$0xff]
    %v474 = vld [vmem:[#allocation8 + $0x58] sm:$0xff]
    %v475 = vld [vmem:[#allocation8 + $0x60] sm:$0xff]
    %v476 = vld [vmem:[#allocation8 + $0x68] sm:$0xff]
    %v477 = vld [vmem:[#allocation8 + $0x70] sm:$0xff]
    %v478 = vld [vmem:[#allocation8 + $0x78] sm:$0xff]
    %v479 = vld [vmem:[#allocation8 + $0x80] sm:$0xff]
    %v480 = vld [vmem:[#allocation8 + $0x88] sm:$0xff]
    %v481 = vld [vmem:[#allocation8 + $0x90] sm:$0xff]
    %v482 = vld [vmem:[#allocation8 + $0x98] sm:$0xff]
    %v483 = vld [vmem:[#allocation8 + $0xa0] sm:$0xff]
    %v484 = vld [vmem:[#allocation8 + $0xa8] sm:$0xff]
    %v485 = vld [vmem:[#allocation8 + $0xb0] sm:$0xff]
    %v486 = vld [vmem:[#allocation8 + $0xb8] sm:$0xff]
    %v487 = vld [vmem:[#allocation8 + $0xc0] sm:$0xff]
    %v488 = vld [vmem:[#allocation8 + $0xc8] sm:$0xff]
    %v489 = vld [vmem:[#allocation8 + $0xd0] sm:$0xff]
    %v490 = vld [vmem:[#allocation8 + $0xd8] sm:$0xff]
    %v491 = vld [vmem:[#allocation8 + $0xe0] sm:$0xff]
    %v492 = vld [vmem:[#allocation8 + $0xe8] sm:$0xff]
    %v493 = vld [vmem:[#allocation8 + $0xf0] sm:$0xff]
    %v494 = vld [vmem:[#allocation8 + $0xf8] sm:$0xff]
    %v495 = vld [vmem:[#allocation8 + $0x100] sm:$0xff]
    %v496 = vld [vmem:[#allocation8 + $0x108] sm:$0xff]
    %v497 = vld [vmem:[#allocation8 + $0x110] sm:$0xff]
    %v498 = vld [vmem:[#allocation8 + $0x118] sm:$0xff]
    %v499 = vld [vmem:[#allocation8 + $0x120] sm:$0xff]
    %v500 = vld [vmem:[#allocation8 + $0x128] sm:$0xff]
    %v501 = vld [vmem:[#allocation8 + $0x130] sm:$0xff]
    %v502 = vld [vmem:[#allocation8 + $0x138] sm:$0xff]
    %v503 = vld [vmem:[#allocation8 + $0x140] sm:$0xff]
    %v504 = vld [vmem:[#allocation8 + $0x148] sm:$0xff]
    %v505 = vld [vmem:[#allocation8 + $0x150] sm:$0xff]
    %v506 = vld [vmem:[#allocation8 + $0x158] sm:$0xff]
    %v507 = vld [vmem:[#allocation8 + $0x160] sm:$0xff]
    %v508 = vld [vmem:[#allocation8 + $0x168] sm:$0xff]
    %v509 = vld [vmem:[#allocation8 + $0x170] sm:$0xff]
    %v510 = vld [vmem:[#allocation8 + $0x178] sm:$0xff]
    %v511 = vld [vmem:[#allocation8 + $0x180] sm:$0xff]
    %v512 = vld [vmem:[#allocation8 + $0x188] sm:$0xff]
    %v513 = vld [vmem:[#allocation8 + $0x190] sm:$0xff]
    %v514 = vld [vmem:[#allocation8 + $0x198] sm:$0xff]
    %v515 = vld [vmem:[#allocation8 + $0x1a0] sm:$0xff]
    %v516 = vld [vmem:[#allocation8 + $0x1a8] sm:$0xff]
    %v517 = vld [vmem:[#allocation8 + $0x1b0] sm:$0xff]
    %v518 = vld [vmem:[#allocation8 + $0x1b8] sm:$0xff]
    %v519 = vld [vmem:[#allocation8 + $0x1c0] sm:$0xff]
    %v520 = vld [vmem:[#allocation8 + $0x1c8] sm:$0xff]
    %v521 = vld [vmem:[#allocation8 + $0x1d0] sm:$0xff]
    %v522 = vld [vmem:[#allocation8 + $0x1d8] sm:$0xff]
    %v523 = vld [vmem:[#allocation8 + $0x1e0] sm:$0xff]
    %v524 = vld [vmem:[#allocation8 + $0x1e8] sm:$0xff]
    %v525 = vld [vmem:[#allocation8 + $0x1f0] sm:$0xff]
    %v526 = vld [vmem:[#allocation8 + $0x1f8] sm:$0xff]
    %v527 = vld [vmem:[#allocation8 + $0x200] sm:$0xff]
    %v528 = vld [vmem:[#allocation8 + $0x208] sm:$0xff]
    %v529 = vld [vmem:[#allocation8 + $0x210] sm:$0xff]
    %v530 = vld [vmem:[#allocation8 + $0x218] sm:$0xff]
    %v531 = vld [vmem:[#allocation8 + $0x220] sm:$0xff]
    %v532 = vld [vmem:[#allocation8 + $0x228] sm:$0xff]
    %v533 = vld [vmem:[#allocation8 + $0x230] sm:$0xff]
    %v534 = vld [vmem:[#allocation8 + $0x238] sm:$0xff]
    %v535 = vld [vmem:[#allocation8 + $0x240] sm:$0xff]
    %v536 = vld [vmem:[#allocation8 + $0x248] sm:$0xff]
    %v537 = vld [vmem:[#allocation8 + $0x250] sm:$0xff]
    %v538 = vld [vmem:[#allocation8 + $0x258] sm:$0xff]
    %v539 = vld [vmem:[#allocation8 + $0x260] sm:$0xff]
    %v540 = vld [vmem:[#allocation8 + $0x268] sm:$0xff]
    %v541 = vld [vmem:[#allocation8 + $0x270] sm:$0xff]
    %v542 = vld [vmem:[#allocation8 + $0x278] sm:$0xff]
    %v543 = vld [vmem:[#allocation8 + $0x280] sm:$0xff]
    %v544 = vld [vmem:[#allocation8 + $0x288] sm:$0xff]
    %v545 = vld [vmem:[#allocation8 + $0x290] sm:$0xff]
    %v546 = vld [vmem:[#allocation8 + $0x298] sm:$0xff]
    %v547 = vld [vmem:[#allocation8 + $0x2a0] sm:$0xff]
    %v548 = vld [vmem:[#allocation8 + $0x2a8] sm:$0xff]
    %v549 = vld [vmem:[#allocation8 + $0x2b0] sm:$0xff]
    %v550 = vld [vmem:[#allocation8 + $0x2b8] sm:$0xff]
    %v551 = vld [vmem:[#allocation8 + $0x2c0] sm:$0xff]
    %v552 = vld [vmem:[#allocation8 + $0x2c8] sm:$0xff]
    %v553 = vld [vmem:[#allocation8 + $0x2d0] sm:$0xff]
    %v554 = vld [vmem:[#allocation8 + $0x2d8] sm:$0xff]
    %v555 = vld [vmem:[#allocation8 + $0x2e0] sm:$0xff]
    %v556 = vld [vmem:[#allocation8 + $0x2e8] sm:$0xff]
    %v557 = vld [vmem:[#allocation8 + $0x2f0] sm:$0xff]
    %v558 = vld [vmem:[#allocation8 + $0x2f8] sm:$0xff]
    %v559 = vld [vmem:[#allocation8 + $0x300] sm:$0xff]
    %v560 = vld [vmem:[#allocation8 + $0x308] sm:$0xff]
    %v561 = vld [vmem:[#allocation8 + $0x310] sm:$0xff]
    %v562 = vld [vmem:[#allocation8 + $0x318] sm:$0xff]
    %v563 = vld [vmem:[#allocation8 + $0x320] sm:$0xff]
    %v564 = vld [vmem:[#allocation8 + $0x328] sm:$0xff]
    %v565 = vld [vmem:[#allocation8 + $0x330] sm:$0xff]
    %v566 = vld [vmem:[#allocation8 + $0x338] sm:$0xff]
    %v567 = vld [vmem:[#allocation8 + $0x340] sm:$0xff]
    %v568 = vld [vmem:[#allocation8 + $0x348] sm:$0xff]
    %v569 = vld [vmem:[#allocation8 + $0x350] sm:$0xff]
    %v570 = vld [vmem:[#allocation8 + $0x358] sm:$0xff]
    %v571 = vld [vmem:[#allocation8 + $0x360] sm:$0xff]
    %v572 = vld [vmem:[#allocation8 + $0x368] sm:$0xff]
    %v573 = vld [vmem:[#allocation8 + $0x370] sm:$0xff]
    %v574 = vld [vmem:[#allocation8 + $0x378] sm:$0xff]
    %v575 = vld [vmem:[#allocation8 + $0x380] sm:$0xff]
    %v576 = vld [vmem:[#allocation8 + $0x388] sm:$0xff]
    %v577 = vld [vmem:[#allocation8 + $0x390] sm:$0xff]
    %v578 = vld [vmem:[#allocation8 + $0x398] sm:$0xff]
    %v579 = vld [vmem:[#allocation8 + $0x3a0] sm:$0xff]
    %v580 = vld [vmem:[#allocation8 + $0x3a8] sm:$0xff]
    %v581 = vld [vmem:[#allocation8 + $0x3b0] sm:$0xff]
    %v582 = vld [vmem:[#allocation8 + $0x3b8] sm:$0xff]
    %v583 = vld [vmem:[#allocation8 + $0x3c0] sm:$0xff]
    %v584 = vld [vmem:[#allocation8 + $0x3c8] sm:$0xff]
    %v585 = vld [vmem:[#allocation8 + $0x3d0] sm:$0xff]
    %v586 = vld [vmem:[#allocation8 + $0x3d8] sm:$0xff]
    %v587 = vld [vmem:[#allocation8 + $0x3e0] sm:$0xff]
    %v588 = vld [vmem:[#allocation8 + $0x3e8] sm:$0xff]
    %v589 = vld [vmem:[#allocation8 + $0x3f0] sm:$0xff]
    %v590 = vld [vmem:[#allocation8 + $0x3f8] sm:$0xff]
    %v591 = vld [vmem:[#allocation8 + $0x400] sm:$0xff]
    %v592 = vld [vmem:[#allocation8 + $0x408] sm:$0xff]
    %v593 = vld [vmem:[#allocation8 + $0x410] sm:$0xff]
    %v594 = vld [vmem:[#allocation8 + $0x418] sm:$0xff]
    %v595 = vld [vmem:[#allocation8 + $0x420] sm:$0xff]
    %v596 = vld [vmem:[#allocation8 + $0x428] sm:$0xff]
    %v597 = vld [vmem:[#allocation8 + $0x430] sm:$0xff]
    %v598 = vld [vmem:[#allocation8 + $0x438] sm:$0xff]
    %v599 = vld [vmem:[#allocation8 + $0x440] sm:$0xff]
    %v600 = vld [vmem:[#allocation8 + $0x448] sm:$0xff]
    %v601 = vld [vmem:[#allocation8 + $0x450] sm:$0xff]
    %v602 = vld [vmem:[#allocation8 + $0x458] sm:$0xff]
    %v603 = vld [vmem:[#allocation8 + $0x460] sm:$0xff]
    %v604 = vld [vmem:[#allocation8 + $0x468] sm:$0xff]
    %v605 = vld [vmem:[#allocation8 + $0x470] sm:$0xff]
    %v606 = vld [vmem:[#allocation8 + $0x478] sm:$0xff]
    %v607 = vld [vmem:[#allocation8 + $0x480] sm:$0xff]
    %v608 = vld [vmem:[#allocation8 + $0x488] sm:$0xff]
    %v609 = vld [vmem:[#allocation8 + $0x490] sm:$0xff]
    %v610 = vld [vmem:[#allocation8 + $0x498] sm:$0xff]
    %v611 = vld [vmem:[#allocation8 + $0x4a0] sm:$0xff]
    %v612 = vld [vmem:[#allocation8 + $0x4a8] sm:$0xff]
    %v613 = vld [vmem:[#allocation8 + $0x4b0] sm:$0xff]
    %v614 = vld [vmem:[#allocation8 + $0x4b8] sm:$0xff]
    %v615 = vld [vmem:[#allocation8 + $0x4c0] sm:$0xff]
    %v616 = vld [vmem:[#allocation8 + $0x4c8] sm:$0xff]
    %v617 = vld [vmem:[#allocation8 + $0x4d0] sm:$0xff]
    %v618 = vld [vmem:[#allocation8 + $0x4d8] sm:$0xff]
    %v619 = vld [vmem:[#allocation8 + $0x4e0] sm:$0xff]
    %v620 = vld [vmem:[#allocation8 + $0x4e8] sm:$0xff]
    %v621 = vld [vmem:[#allocation8 + $0x4f0] sm:$0xff]
    %v622 = vld [vmem:[#allocation8 + $0x4f8] sm:$0xff]
    %v623 = vld [vmem:[#allocation8 + $0x500] sm:$0xff]
    %v624 = vld [vmem:[#allocation8 + $0x508] sm:$0xff]
    %v625 = vld [vmem:[#allocation8 + $0x510] sm:$0xff]
    %v626 = vld [vmem:[#allocation8 + $0x518] sm:$0xff]
    %v627 = vld [vmem:[#allocation8 + $0x520] sm:$0xff]
    %v628 = vld [vmem:[#allocation8 + $0x528] sm:$0xff]
    %v629 = vld [vmem:[#allocation8 + $0x530] sm:$0xff]
    %v630 = vld [vmem:[#allocation8 + $0x538] sm:$0xff]
    %v631 = vld [vmem:[#allocation8 + $0x540] sm:$0xff]
    %v632 = vld [vmem:[#allocation8 + $0x548] sm:$0xff]
    %v633 = vld [vmem:[#allocation8 + $0x550] sm:$0xff]
    %v634 = vld [vmem:[#allocation8 + $0x558] sm:$0xff]
    %v635 = vld [vmem:[#allocation8 + $0x560] sm:$0xff]
    %v636 = vld [vmem:[#allocation8 + $0x568] sm:$0xff]
    %v637 = vld [vmem:[#allocation8 + $0x570] sm:$0xff]
    %v638 = vld [vmem:[#allocation8 + $0x578] sm:$0xff]
    %v639 = vld [vmem:[#allocation8 + $0x580] sm:$0xff]
    %v640 = vld [vmem:[#allocation8 + $0x588] sm:$0xff]
    %v641 = vld [vmem:[#allocation8 + $0x590] sm:$0xff]
    %v642 = vld [vmem:[#allocation8 + $0x598] sm:$0xff]
    %v643 = vld [vmem:[#allocation8 + $0x5a0] sm:$0xff]
    %v644 = vld [vmem:[#allocation8 + $0x5a8] sm:$0xff]
    %v645 = vld [vmem:[#allocation8 + $0x5b0] sm:$0xff]
    %v646 = vld [vmem:[#allocation8 + $0x5b8] sm:$0xff]
    %v647 = vld [vmem:[#allocation8 + $0x5c0] sm:$0xff]
    %v648 = vld [vmem:[#allocation8 + $0x5c8] sm:$0xff]
    %v649 = vld [vmem:[#allocation8 + $0x5d0] sm:$0xff]
    %v650 = vld [vmem:[#allocation8 + $0x5d8] sm:$0xff]
    %v651 = vld [vmem:[#allocation8 + $0x5e0] sm:$0xff]
    %v652 = vld [vmem:[#allocation8 + $0x5e8] sm:$0xff]
    %v653 = vld [vmem:[#allocation8 + $0x5f0] sm:$0xff]
    %v654 = vld [vmem:[#allocation8 + $0x5f8] sm:$0xff]
    %v655 = vld [vmem:[%s4] sm:$0x7]
    %v657 = vlaneseq
    %v658 = vshrl.u32 %v657, 7
    %v659 = vsub.s32 0, %v658
    %v660 = vrot.slane %v655, %v659
    %v661 = vlaneseq
    %v662 = vshrl.u32 %v661, 7
    %v663 = vsub.s32 1, %v662
    %v664 = vrot.slane %v655, %v663
    %v665 = vlaneseq
    %v666 = vshrl.u32 %v665, 7
    %v667 = vsub.s32 2, %v666
    %v668 = vrot.slane %v655, %v667
    %672 = vmatprep.subr.mxu0 %v509
    %673 = vmatpush1.msra.mxu0 %v508
    %674 = vmatprep.subr.mxu0 %v506
    %675 = vmatpush1.msra.mxu0 %v505
    %676 = vmatprep.subr.mxu0 %v503
    %677 = vmatpush1.msra.mxu0 %v502
    %678 = vmatprep.subr.mxu0 %v500
    %679 = vmatpush1.msra.mxu0 %v499
    %680 = vmatprep.subr.mxu0 %v497
    %681 = vmatpush1.msra.mxu0 %v496
    %682 = vmatprep.subr.mxu0 %v494
    %683 = vmatpush1.msra.mxu0 %v493
    %684 = vmatprep.subr.mxu0 %v491
    %685 = vmatpush1.msra.mxu0 %v490
    %686 = vmatprep.subr.mxu0 %v488
    %687 = vmatpush1.msra.mxu0 %v487
    %688 = vmatprep.subr.mxu0 %v485
    %689 = vmatpush1.msra.mxu0 %v484
    %690 = vmatprep.subr.mxu0 %v482
    %691 = vmatpush1.msra.mxu0 %v481
    %692 = vmatprep.subr.mxu0 %v479
    %693 = vmatpush1.msra.mxu0 %v478
    %694 = vmatprep.subr.mxu0 %v476
    %695 = vmatpush1.msra.mxu0 %v475
    %696 = vmatprep.subr.mxu0 %v473
    %697 = vmatpush1.msra.mxu0 %v472
    %698 = vmatprep.subr.mxu0 %v470
    %699 = vmatpush1.msra.mxu0 %v469
    %700 = vmatprep.subr.mxu0 %v467
    %701 = vmatpush1.msra.mxu0 %v466
    %702 = vmatprep.subr.mxu0 %v464
    %703 = vmatpush1.msra.mxu0 %v463
    %704 = vmatprep.subr.mxu0 %v557
    %705 = vmatpush2.msra.mxu0 %v556
    %706 = vmatprep.subr.mxu0 %v554
    %707 = vmatpush2.msra.mxu0 %v553
    %708 = vmatprep.subr.mxu0 %v551
    %709 = vmatpush2.msra.mxu0 %v550
    %710 = vmatprep.subr.mxu0 %v548
    %711 = vmatpush2.msra.mxu0 %v547
    %712 = vmatprep.subr.mxu0 %v545
    %713 = vmatpush2.msra.mxu0 %v544
    %714 = vmatprep.subr.mxu0 %v542
    %715 = vmatpush2.msra.mxu0 %v541
    %716 = vmatprep.subr.mxu0 %v539
    %717 = vmatpush2.msra.mxu0 %v538
    %718 = vmatprep.subr.mxu0 %v536
    %719 = vmatpush2.msra.mxu0 %v535
    %720 = vmatprep.subr.mxu0 %v533
    %721 = vmatpush2.msra.mxu0 %v532
    %722 = vmatprep.subr.mxu0 %v530
    %723 = vmatpush2.msra.mxu0 %v529
    %724 = vmatprep.subr.mxu0 %v527
    %725 = vmatpush2.msra.mxu0 %v526
    %726 = vmatprep.subr.mxu0 %v524
    %727 = vmatpush2.msra.mxu0 %v523
    %728 = vmatprep.subr.mxu0 %v521
    %729 = vmatpush2.msra.mxu0 %v520
    %730 = vmatprep.subr.mxu0 %v518
    %731 = vmatpush2.msra.mxu0 %v517
    %732 = vmatprep.subr.mxu0 %v515
    %733 = vmatpush2.msra.mxu0 %v514
    %734 = vmatprep.subr.mxu0 %v512
    %735 = vmatpush2.msra.mxu0 %v511
    %736 = vmatprep.mubr.f32.mxu0 %v456
    %737 = vmatmul.mubr.f32.gmra.mxu0 %v455
    %v738 = vpop.f32.mrf.mxu0
    %v739 = vadd.f32 %v660, %v738
    %v740 = vpop.f32.mrf.mxu0
    %v741 = vadd.f32 %v664, %v740
    %742 = vdwg.mxu0
    %743 = vmatprep.subr.mxu0 %v605
    %744 = vmatpush1.msra.mxu0 %v604
    %745 = vmatprep.subr.mxu0 %v602
    %746 = vmatpush1.msra.mxu0 %v601
    %747 = vmatprep.subr.mxu0 %v599
    %748 = vmatpush1.msra.mxu0 %v598
    %749 = vmatprep.subr.mxu0 %v596
    %750 = vmatpush1.msra.mxu0 %v595
    %751 = vmatprep.subr.mxu0 %v593
    %752 = vmatpush1.msra.mxu0 %v592
    %753 = vmatprep.subr.mxu0 %v590
    %754 = vmatpush1.msra.mxu0 %v589
    %755 = vmatprep.subr.mxu0 %v587
    %756 = vmatpush1.msra.mxu0 %v586
    %757 = vmatprep.subr.mxu0 %v584
    %758 = vmatpush1.msra.mxu0 %v583
    %759 = vmatprep.subr.mxu0 %v581
    %760 = vmatpush1.msra.mxu0 %v580
    %761 = vmatprep.subr.mxu0 %v578
    %762 = vmatpush1.msra.mxu0 %v577
    %763 = vmatprep.subr.mxu0 %v575
    %764 = vmatpush1.msra.mxu0 %v574
    %765 = vmatprep.subr.mxu0 %v572
    %766 = vmatpush1.msra.mxu0 %v571
    %767 = vmatprep.subr.mxu0 %v569
    %768 = vmatpush1.msra.mxu0 %v568
    %769 = vmatprep.subr.mxu0 %v566
    %770 = vmatpush1.msra.mxu0 %v565
    %771 = vmatprep.subr.mxu0 %v563
    %772 = vmatpush1.msra.mxu0 %v562
    %773 = vmatprep.subr.mxu0 %v560
    %774 = vmatpush1.msra.mxu0 %v559
    %775 = vmatprep.subr.mxu0 %v653
    %776 = vmatpush2.msra.mxu0 %v652
    %777 = vmatprep.subr.mxu0 %v650
    %778 = vmatpush2.msra.mxu0 %v649
    %779 = vmatprep.subr.mxu0 %v647
    %780 = vmatpush2.msra.mxu0 %v646
    %781 = vmatprep.subr.mxu0 %v644
    %782 = vmatpush2.msra.mxu0 %v643
    %783 = vmatprep.subr.mxu0 %v641
    %784 = vmatpush2.msra.mxu0 %v640
    %785 = vmatprep.subr.mxu0 %v638
    %786 = vmatpush2.msra.mxu0 %v637
    %787 = vmatprep.subr.mxu0 %v635
    %788 = vmatpush2.msra.mxu0 %v634
    %789 = vmatprep.subr.mxu0 %v632
    %790 = vmatpush2.msra.mxu0 %v631
    %791 = vmatprep.subr.mxu0 %v629
    %792 = vmatpush2.msra.mxu0 %v628
    %793 = vmatprep.subr.mxu0 %v626
    %794 = vmatpush2.msra.mxu0 %v625
    %795 = vmatprep.subr.mxu0 %v623
    %796 = vmatpush2.msra.mxu0 %v622
    %797 = vmatprep.subr.mxu0 %v620
    %798 = vmatpush2.msra.mxu0 %v619
    %799 = vmatprep.subr.mxu0 %v617
    %800 = vmatpush2.msra.mxu0 %v616
    %801 = vmatprep.subr.mxu0 %v614
    %802 = vmatpush2.msra.mxu0 %v613
    %803 = vmatprep.subr.mxu0 %v611
    %804 = vmatpush2.msra.mxu0 %v610
    %805 = vmatprep.subr.mxu0 %v608
    %806 = vmatpush2.msra.mxu0 %v607
    %807 = vmatprep.mubr.f32.mxu0 %v458
    %808 = vmatmul.mubr.f32.gmra.mxu0 %v457
    %v809 = vpop.f32.mrf.mxu0
    %v810 = vadd.f32 %v739, %v809
    %v811 = vpop.f32.mrf.mxu0
    %v812 = vadd.f32 %v741, %v811
    %813 = vdwg.mxu0
    %814 = vmatprep.subr.mxu0 0.0
    %815 = vmatpush1.msra.mxu0 %v510
    %816 = vmatprep.subr.mxu0 0.0
    %817 = vmatpush1.msra.mxu0 %v507
    %818 = vmatprep.subr.mxu0 0.0
    %819 = vmatpush1.msra.mxu0 %v504
    %820 = vmatprep.subr.mxu0 0.0
    %821 = vmatpush1.msra.mxu0 %v501
    %822 = vmatprep.subr.mxu0 0.0
    %823 = vmatpush1.msra.mxu0 %v498
    %824 = vmatprep.subr.mxu0 0.0
    %825 = vmatpush1.msra.mxu0 %v495
    %826 = vmatprep.subr.mxu0 0.0
    %827 = vmatpush1.msra.mxu0 %v492
    %828 = vmatprep.subr.mxu0 0.0
    %829 = vmatpush1.msra.mxu0 %v489
    %830 = vmatprep.subr.mxu0 0.0
    %831 = vmatpush1.msra.mxu0 %v486
    %832 = vmatprep.subr.mxu0 0.0
    %833 = vmatpush1.msra.mxu0 %v483
    %834 = vmatprep.subr.mxu0 0.0
    %835 = vmatpush1.msra.mxu0 %v480
    %836 = vmatprep.subr.mxu0 0.0
    %837 = vmatpush1.msra.mxu0 %v477
    %838 = vmatprep.subr.mxu0 0.0
    %839 = vmatpush1.msra.mxu0 %v474
    %840 = vmatprep.subr.mxu0 0.0
    %841 = vmatpush1.msra.mxu0 %v471
    %842 = vmatprep.subr.mxu0 0.0
    %843 = vmatpush1.msra.mxu0 %v468
    %844 = vmatprep.subr.mxu0 0.0
    %845 = vmatpush1.msra.mxu0 %v465
    %846 = vmatprep.subr.mxu0 0.0
    %847 = vmatpush2.msra.mxu0 %v558
    %848 = vmatprep.subr.mxu0 0.0
    %849 = vmatpush2.msra.mxu0 %v555
    %850 = vmatprep.subr.mxu0 0.0
    %851 = vmatpush2.msra.mxu0 %v552
    %852 = vmatprep.subr.mxu0 0.0
    %853 = vmatpush2.msra.mxu0 %v549
    %854 = vmatprep.subr.mxu0 0.0
    %855 = vmatpush2.msra.mxu0 %v546
    %856 = vmatprep.subr.mxu0 0.0
    %857 = vmatpush2.msra.mxu0 %v543
    %858 = vmatprep.subr.mxu0 0.0
    %859 = vmatpush2.msra.mxu0 %v540
    %860 = vmatprep.subr.mxu0 0.0
    %861 = vmatpush2.msra.mxu0 %v537
    %862 = vmatprep.subr.mxu0 0.0
    %863 = vmatpush2.msra.mxu0 %v534
    %864 = vmatprep.subr.mxu0 0.0
    %865 = vmatpush2.msra.mxu0 %v531
    %866 = vmatprep.subr.mxu0 0.0
    %867 = vmatpush2.msra.mxu0 %v528
    %868 = vmatprep.subr.mxu0 0.0
    %869 = vmatpush2.msra.mxu0 %v525
    %870 = vmatprep.subr.mxu0 0.0
    %871 = vmatpush2.msra.mxu0 %v522
    %872 = vmatprep.subr.mxu0 0.0
    %873 = vmatpush2.msra.mxu0 %v519
    %874 = vmatprep.subr.mxu0 0.0
    %875 = vmatpush2.msra.mxu0 %v516
    %876 = vmatprep.subr.mxu0 0.0
    %877 = vmatpush2.msra.mxu0 %v513
    %878 = vmatprep.mubr.f32.mxu0 %v456
    %879 = vmatmul.mubr.f32.gmra.mxu0 %v455
    %v880 = vpop.f32.mrf.mxu0
    %v881 = vadd.f32 %v668, %v880
    %v882 = vpop.f32.mrf.mxu0
    %883 = vdwg.mxu0
    %884 = vmatprep.subr.mxu0 0.0
    %885 = vmatpush1.msra.mxu0 %v606
    %886 = vmatprep.subr.mxu0 0.0
    %887 = vmatpush1.msra.mxu0 %v603
    %888 = vmatprep.subr.mxu0 0.0
    %889 = vmatpush1.msra.mxu0 %v600
    %890 = vmatprep.subr.mxu0 0.0
    %891 = vmatpush1.msra.mxu0 %v597
    %892 = vmatprep.subr.mxu0 0.0
    %893 = vmatpush1.msra.mxu0 %v594
    %894 = vmatprep.subr.mxu0 0.0
    %895 = vmatpush1.msra.mxu0 %v591
    %896 = vmatprep.subr.mxu0 0.0
    %897 = vmatpush1.msra.mxu0 %v588
    %898 = vmatprep.subr.mxu0 0.0
    %899 = vmatpush1.msra.mxu0 %v585
    %900 = vmatprep.subr.mxu0 0.0
    %901 = vmatpush1.msra.mxu0 %v582
    %902 = vmatprep.subr.mxu0 0.0
    %903 = vmatpush1.msra.mxu0 %v579
    %904 = vmatprep.subr.mxu0 0.0
    %905 = vmatpush1.msra.mxu0 %v576
    %906 = vmatprep.subr.mxu0 0.0
    %907 = vmatpush1.msra.mxu0 %v573
    %908 = vmatprep.subr.mxu0 0.0
    %909 = vmatpush1.msra.mxu0 %v570
    %910 = vmatprep.subr.mxu0 0.0
    %911 = vmatpush1.msra.mxu0 %v567
    %912 = vmatprep.subr.mxu0 0.0
    %913 = vmatpush1.msra.mxu0 %v564
    %914 = vmatprep.subr.mxu0 0.0
    %915 = vmatpush1.msra.mxu0 %v561
    %916 = vmatprep.subr.mxu0 0.0
    %917 = vmatpush2.msra.mxu0 %v654
    %918 = vmatprep.subr.mxu0 0.0
    %919 = vmatpush2.msra.mxu0 %v651
    %920 = vmatprep.subr.mxu0 0.0
    %921 = vmatpush2.msra.mxu0 %v648
    %922 = vmatprep.subr.mxu0 0.0
    %923 = vmatpush2.msra.mxu0 %v645
    %924 = vmatprep.subr.mxu0 0.0
    %925 = vmatpush2.msra.mxu0 %v642
    %926 = vmatprep.subr.mxu0 0.0
    %927 = vmatpush2.msra.mxu0 %v639
    %928 = vmatprep.subr.mxu0 0.0
    %929 = vmatpush2.msra.mxu0 %v636
    %930 = vmatprep.subr.mxu0 0.0
    %931 = vmatpush2.msra.mxu0 %v633
    %932 = vmatprep.subr.mxu0 0.0
    %933 = vmatpush2.msra.mxu0 %v630
    %934 = vmatprep.subr.mxu0 0.0
    %935 = vmatpush2.msra.mxu0 %v627
    %936 = vmatprep.subr.mxu0 0.0
    %937 = vmatpush2.msra.mxu0 %v624
    %938 = vmatprep.subr.mxu0 0.0
    %939 = vmatpush2.msra.mxu0 %v621
    %940 = vmatprep.subr.mxu0 0.0
    %941 = vmatpush2.msra.mxu0 %v618
    %942 = vmatprep.subr.mxu0 0.0
    %943 = vmatpush2.msra.mxu0 %v615
    %944 = vmatprep.subr.mxu0 0.0
    %945 = vmatpush2.msra.mxu0 %v612
    %946 = vmatprep.subr.mxu0 0.0
    %947 = vmatpush2.msra.mxu0 %v609
    %948 = vmatprep.mubr.f32.mxu0 %v458
    %949 = vmatmul.mubr.f32.gmra.mxu0 %v457
    %v950 = vpop.f32.mrf.mxu0
    %v951 = vadd.f32 %v881, %v950
    %v952 = vpop.f32.mrf.mxu0
    %953 = vdwg.mxu0
    %v954 = vmax.f32 %v810, 0.0
    %v955 = vmax.f32 %v812, 0.0
    %v956 = vmax.f32 %v951, 0.0
    %v957 = vld [vmem:[#allocation10] sm:$0xff]
    %v958 = vld [vmem:[#allocation10 + $0x8] sm:$0xff]
    %v959 = vld [vmem:[#allocation10 + $0x10] sm:$0xff]
    %v960 = vld [vmem:[#allocation10 + $0x18] sm:$0xff]
    %v961 = vld [vmem:[#allocation10 + $0x20] sm:$0xff]
    %v962 = vld [vmem:[#allocation10 + $0x28] sm:$0xff]
    %v963 = vld [vmem:[#allocation10 + $0x30] sm:$0xff]
    %v964 = vld [vmem:[#allocation10 + $0x38] sm:$0xff]
    %v965 = vld [vmem:[#allocation10 + $0x40] sm:$0xff]
    %v966 = vld [vmem:[#allocation10 + $0x48] sm:$0xff]
    %v967 = vld [vmem:[#allocation10 + $0x50] sm:$0xff]
    %v968 = vld [vmem:[#allocation10 + $0x58] sm:$0xff]
    %v969 = vld [vmem:[#allocation10 + $0x60] sm:$0xff]
    %v970 = vld [vmem:[#allocation10 + $0x68] sm:$0xff]
    %v971 = vld [vmem:[#allocation10 + $0x70] sm:$0xff]
    %v972 = vld [vmem:[#allocation10 + $0x78] sm:$0xff]
    %v973 = vld [vmem:[#allocation10 + $0x80] sm:$0xff]
    %v974 = vld [vmem:[#allocation10 + $0x88] sm:$0xff]
    %v975 = vld [vmem:[#allocation10 + $0x90] sm:$0xff]
    %v976 = vld [vmem:[#allocation10 + $0x98] sm:$0xff]
    %v977 = vld [vmem:[#allocation10 + $0xa0] sm:$0xff]
    %v978 = vld [vmem:[#allocation10 + $0xa8] sm:$0xff]
    %v979 = vld [vmem:[#allocation10 + $0xb0] sm:$0xff]
    %v980 = vld [vmem:[#allocation10 + $0xb8] sm:$0xff]
    %v981 = vld [vmem:[#allocation10 + $0xc0] sm:$0xff]
    %v982 = vld [vmem:[#allocation10 + $0xc8] sm:$0xff]
    %v983 = vld [vmem:[#allocation10 + $0xd0] sm:$0xff]
    %v984 = vld [vmem:[#allocation10 + $0xd8] sm:$0xff]
    %v985 = vld [vmem:[#allocation10 + $0xe0] sm:$0xff]
    %v986 = vld [vmem:[#allocation10 + $0xe8] sm:$0xff]
    %v987 = vld [vmem:[#allocation10 + $0xf0] sm:$0xff]
    %v988 = vld [vmem:[#allocation10 + $0xf8] sm:$0xff]
    %v989 = vld [vmem:[#allocation10 + $0x100] sm:$0xff]
    %v990 = vld [vmem:[#allocation10 + $0x108] sm:$0xff]
    %v991 = vld [vmem:[#allocation10 + $0x110] sm:$0xff]
    %v992 = vld [vmem:[#allocation10 + $0x118] sm:$0xff]
    %v993 = vld [vmem:[#allocation10 + $0x120] sm:$0xff]
    %v994 = vld [vmem:[#allocation10 + $0x128] sm:$0xff]
    %v995 = vld [vmem:[#allocation10 + $0x130] sm:$0xff]
    %v996 = vld [vmem:[#allocation10 + $0x138] sm:$0xff]
    %v997 = vld [vmem:[#allocation10 + $0x140] sm:$0xff]
    %v998 = vld [vmem:[#allocation10 + $0x148] sm:$0xff]
    %v999 = vld [vmem:[#allocation10 + $0x150] sm:$0xff]
    %v1000 = vld [vmem:[#allocation10 + $0x158] sm:$0xff]
    %v1001 = vld [vmem:[#allocation10 + $0x160] sm:$0xff]
    %v1002 = vld [vmem:[#allocation10 + $0x168] sm:$0xff]
    %v1003 = vld [vmem:[#allocation10 + $0x170] sm:$0xff]
    %v1004 = vld [vmem:[#allocation10 + $0x178] sm:$0xff]
    %v1005 = vld [vmem:[#allocation10 + $0x180] sm:$0xff]
    %v1006 = vld [vmem:[#allocation10 + $0x188] sm:$0xff]
    %v1007 = vld [vmem:[#allocation10 + $0x190] sm:$0xff]
    %v1008 = vld [vmem:[#allocation10 + $0x198] sm:$0xff]
    %v1009 = vld [vmem:[#allocation10 + $0x1a0] sm:$0xff]
    %v1010 = vld [vmem:[#allocation10 + $0x1a8] sm:$0xff]
    %v1011 = vld [vmem:[#allocation10 + $0x1b0] sm:$0xff]
    %v1012 = vld [vmem:[#allocation10 + $0x1b8] sm:$0xff]
    %v1013 = vld [vmem:[#allocation10 + $0x1c0] sm:$0xff]
    %v1014 = vld [vmem:[#allocation10 + $0x1c8] sm:$0xff]
    %v1015 = vld [vmem:[#allocation10 + $0x1d0] sm:$0xff]
    %v1016 = vld [vmem:[#allocation10 + $0x1d8] sm:$0xff]
    %v1017 = vld [vmem:[#allocation10 + $0x1e0] sm:$0xff]
    %v1018 = vld [vmem:[#allocation10 + $0x1e8] sm:$0xff]
    %v1019 = vld [vmem:[#allocation10 + $0x1f0] sm:$0xff]
    %v1020 = vld [vmem:[#allocation10 + $0x1f8] sm:$0xff]
    %v1021 = vld [vmem:[#allocation10 + $0x200] sm:$0xff]
    %v1022 = vld [vmem:[#allocation10 + $0x208] sm:$0xff]
    %v1023 = vld [vmem:[#allocation10 + $0x210] sm:$0xff]
    %v1024 = vld [vmem:[#allocation10 + $0x218] sm:$0xff]
    %v1025 = vld [vmem:[#allocation10 + $0x220] sm:$0xff]
    %v1026 = vld [vmem:[#allocation10 + $0x228] sm:$0xff]
    %v1027 = vld [vmem:[#allocation10 + $0x230] sm:$0xff]
    %v1028 = vld [vmem:[#allocation10 + $0x238] sm:$0xff]
    %v1029 = vld [vmem:[#allocation10 + $0x240] sm:$0xff]
    %v1030 = vld [vmem:[#allocation10 + $0x248] sm:$0xff]
    %v1031 = vld [vmem:[#allocation10 + $0x250] sm:$0xff]
    %v1032 = vld [vmem:[#allocation10 + $0x258] sm:$0xff]
    %v1033 = vld [vmem:[#allocation10 + $0x260] sm:$0xff]
    %v1034 = vld [vmem:[#allocation10 + $0x268] sm:$0xff]
    %v1035 = vld [vmem:[#allocation10 + $0x270] sm:$0xff]
    %v1036 = vld [vmem:[#allocation10 + $0x278] sm:$0xff]
    %v1037 = vld [vmem:[#allocation10 + $0x280] sm:$0xff]
    %v1038 = vld [vmem:[#allocation10 + $0x288] sm:$0xff]
    %v1039 = vld [vmem:[#allocation10 + $0x290] sm:$0xff]
    %v1040 = vld [vmem:[#allocation10 + $0x298] sm:$0xff]
    %v1041 = vld [vmem:[#allocation10 + $0x2a0] sm:$0xff]
    %v1042 = vld [vmem:[#allocation10 + $0x2a8] sm:$0xff]
    %v1043 = vld [vmem:[#allocation10 + $0x2b0] sm:$0xff]
    %v1044 = vld [vmem:[#allocation10 + $0x2b8] sm:$0xff]
    %v1045 = vld [vmem:[#allocation10 + $0x2c0] sm:$0xff]
    %v1046 = vld [vmem:[#allocation10 + $0x2c8] sm:$0xff]
    %v1047 = vld [vmem:[#allocation10 + $0x2d0] sm:$0xff]
    %v1048 = vld [vmem:[#allocation10 + $0x2d8] sm:$0xff]
    %v1049 = vld [vmem:[#allocation10 + $0x2e0] sm:$0xff]
    %v1050 = vld [vmem:[#allocation10 + $0x2e8] sm:$0xff]
    %v1051 = vld [vmem:[#allocation10 + $0x2f0] sm:$0xff]
    %v1052 = vld [vmem:[#allocation10 + $0x2f8] sm:$0xff]
    %v1053 = vld [vmem:[#allocation10 + $0x300] sm:$0xff]
    %v1054 = vld [vmem:[#allocation10 + $0x308] sm:$0xff]
    %v1055 = vld [vmem:[#allocation10 + $0x310] sm:$0xff]
    %v1056 = vld [vmem:[#allocation10 + $0x318] sm:$0xff]
    %v1057 = vld [vmem:[#allocation10 + $0x320] sm:$0xff]
    %v1058 = vld [vmem:[#allocation10 + $0x328] sm:$0xff]
    %v1059 = vld [vmem:[#allocation10 + $0x330] sm:$0xff]
    %v1060 = vld [vmem:[#allocation10 + $0x338] sm:$0xff]
    %v1061 = vld [vmem:[#allocation10 + $0x340] sm:$0xff]
    %v1062 = vld [vmem:[#allocation10 + $0x348] sm:$0xff]
    %v1063 = vld [vmem:[#allocation10 + $0x350] sm:$0xff]
    %v1064 = vld [vmem:[#allocation10 + $0x358] sm:$0xff]
    %v1065 = vld [vmem:[#allocation10 + $0x360] sm:$0xff]
    %v1066 = vld [vmem:[#allocation10 + $0x368] sm:$0xff]
    %v1067 = vld [vmem:[#allocation10 + $0x370] sm:$0xff]
    %v1068 = vld [vmem:[#allocation10 + $0x378] sm:$0xff]
    %v1069 = vld [vmem:[#allocation10 + $0x380] sm:$0xff]
    %v1070 = vld [vmem:[#allocation10 + $0x388] sm:$0xff]
    %v1071 = vld [vmem:[#allocation10 + $0x390] sm:$0xff]
    %v1072 = vld [vmem:[#allocation10 + $0x398] sm:$0xff]
    %v1073 = vld [vmem:[#allocation10 + $0x3a0] sm:$0xff]
    %v1074 = vld [vmem:[#allocation10 + $0x3a8] sm:$0xff]
    %v1075 = vld [vmem:[#allocation10 + $0x3b0] sm:$0xff]
    %v1076 = vld [vmem:[#allocation10 + $0x3b8] sm:$0xff]
    %v1077 = vld [vmem:[#allocation10 + $0x3c0] sm:$0xff]
    %v1078 = vld [vmem:[#allocation10 + $0x3c8] sm:$0xff]
    %v1079 = vld [vmem:[#allocation10 + $0x3d0] sm:$0xff]
    %v1080 = vld [vmem:[#allocation10 + $0x3d8] sm:$0xff]
    %v1081 = vld [vmem:[#allocation10 + $0x3e0] sm:$0xff]
    %v1082 = vld [vmem:[#allocation10 + $0x3e8] sm:$0xff]
    %v1083 = vld [vmem:[#allocation10 + $0x3f0] sm:$0xff]
    %v1084 = vld [vmem:[#allocation10 + $0x3f8] sm:$0xff]
    %v1085 = vld [vmem:[#allocation10 + $0x400] sm:$0xff]
    %v1086 = vld [vmem:[#allocation10 + $0x408] sm:$0xff]
    %v1087 = vld [vmem:[#allocation10 + $0x410] sm:$0xff]
    %v1088 = vld [vmem:[#allocation10 + $0x418] sm:$0xff]
    %v1089 = vld [vmem:[#allocation10 + $0x420] sm:$0xff]
    %v1090 = vld [vmem:[#allocation10 + $0x428] sm:$0xff]
    %v1091 = vld [vmem:[#allocation10 + $0x430] sm:$0xff]
    %v1092 = vld [vmem:[#allocation10 + $0x438] sm:$0xff]
    %v1093 = vld [vmem:[#allocation10 + $0x440] sm:$0xff]
    %v1094 = vld [vmem:[#allocation10 + $0x448] sm:$0xff]
    %v1095 = vld [vmem:[#allocation10 + $0x450] sm:$0xff]
    %v1096 = vld [vmem:[#allocation10 + $0x458] sm:$0xff]
    %v1097 = vld [vmem:[#allocation10 + $0x460] sm:$0xff]
    %v1098 = vld [vmem:[#allocation10 + $0x468] sm:$0xff]
    %v1099 = vld [vmem:[#allocation10 + $0x470] sm:$0xff]
    %v1100 = vld [vmem:[#allocation10 + $0x478] sm:$0xff]
    %v1101 = vld [vmem:[#allocation10 + $0x480] sm:$0xff]
    %v1102 = vld [vmem:[#allocation10 + $0x488] sm:$0xff]
    %v1103 = vld [vmem:[#allocation10 + $0x490] sm:$0xff]
    %v1104 = vld [vmem:[#allocation10 + $0x498] sm:$0xff]
    %v1105 = vld [vmem:[#allocation10 + $0x4a0] sm:$0xff]
    %v1106 = vld [vmem:[#allocation10 + $0x4a8] sm:$0xff]
    %v1107 = vld [vmem:[#allocation10 + $0x4b0] sm:$0xff]
    %v1108 = vld [vmem:[#allocation10 + $0x4b8] sm:$0xff]
    %v1109 = vld [vmem:[#allocation10 + $0x4c0] sm:$0xff]
    %v1110 = vld [vmem:[#allocation10 + $0x4c8] sm:$0xff]
    %v1111 = vld [vmem:[#allocation10 + $0x4d0] sm:$0xff]
    %v1112 = vld [vmem:[#allocation10 + $0x4d8] sm:$0xff]
    %v1113 = vld [vmem:[#allocation10 + $0x4e0] sm:$0xff]
    %v1114 = vld [vmem:[#allocation10 + $0x4e8] sm:$0xff]
    %v1115 = vld [vmem:[#allocation10 + $0x4f0] sm:$0xff]
    %v1116 = vld [vmem:[#allocation10 + $0x4f8] sm:$0xff]
    %v1117 = vld [vmem:[#allocation10 + $0x500] sm:$0xff]
    %v1118 = vld [vmem:[#allocation10 + $0x508] sm:$0xff]
    %v1119 = vld [vmem:[#allocation10 + $0x510] sm:$0xff]
    %v1120 = vld [vmem:[#allocation10 + $0x518] sm:$0xff]
    %v1121 = vld [vmem:[#allocation10 + $0x520] sm:$0xff]
    %v1122 = vld [vmem:[#allocation10 + $0x528] sm:$0xff]
    %v1123 = vld [vmem:[#allocation10 + $0x530] sm:$0xff]
    %v1124 = vld [vmem:[#allocation10 + $0x538] sm:$0xff]
    %v1125 = vld [vmem:[#allocation10 + $0x540] sm:$0xff]
    %v1126 = vld [vmem:[#allocation10 + $0x548] sm:$0xff]
    %v1127 = vld [vmem:[#allocation10 + $0x550] sm:$0xff]
    %v1128 = vld [vmem:[#allocation10 + $0x558] sm:$0xff]
    %v1129 = vld [vmem:[#allocation10 + $0x560] sm:$0xff]
    %v1130 = vld [vmem:[#allocation10 + $0x568] sm:$0xff]
    %v1131 = vld [vmem:[#allocation10 + $0x570] sm:$0xff]
    %v1132 = vld [vmem:[#allocation10 + $0x578] sm:$0xff]
    %v1133 = vld [vmem:[#allocation10 + $0x580] sm:$0xff]
    %v1134 = vld [vmem:[#allocation10 + $0x588] sm:$0xff]
    %v1135 = vld [vmem:[#allocation10 + $0x590] sm:$0xff]
    %v1136 = vld [vmem:[#allocation10 + $0x598] sm:$0xff]
    %v1137 = vld [vmem:[#allocation10 + $0x5a0] sm:$0xff]
    %v1138 = vld [vmem:[#allocation10 + $0x5a8] sm:$0xff]
    %v1139 = vld [vmem:[#allocation10 + $0x5b0] sm:$0xff]
    %v1140 = vld [vmem:[#allocation10 + $0x5b8] sm:$0xff]
    %v1141 = vld [vmem:[#allocation10 + $0x5c0] sm:$0xff]
    %v1142 = vld [vmem:[#allocation10 + $0x5c8] sm:$0xff]
    %v1143 = vld [vmem:[#allocation10 + $0x5d0] sm:$0xff]
    %v1144 = vld [vmem:[#allocation10 + $0x5d8] sm:$0xff]
    %v1145 = vld [vmem:[#allocation10 + $0x5e0] sm:$0xff]
    %v1146 = vld [vmem:[#allocation10 + $0x5e8] sm:$0xff]
    %v1147 = vld [vmem:[#allocation10 + $0x5f0] sm:$0xff]
    %v1148 = vld [vmem:[#allocation10 + $0x5f8] sm:$0xff]
    %v1149 = vld [vmem:[%s6] sm:$0x7]
    %v1151 = vlaneseq
    %v1152 = vshrl.u32 %v1151, 7
    %v1153 = vsub.s32 0, %v1152
    %v1154 = vrot.slane %v1149, %v1153
    %v1155 = vlaneseq
    %v1156 = vshrl.u32 %v1155, 7
    %v1157 = vsub.s32 1, %v1156
    %v1158 = vrot.slane %v1149, %v1157
    %v1159 = vlaneseq
    %v1160 = vshrl.u32 %v1159, 7
    %v1161 = vsub.s32 2, %v1160
    %v1162 = vrot.slane %v1149, %v1161
    %1166 = vmatprep.subr.mxu0 %v1003
    %1167 = vmatpush1.msra.mxu0 %v1002
    %1168 = vmatprep.subr.mxu0 %v1000
    %1169 = vmatpush1.msra.mxu0 %v999
    %1170 = vmatprep.subr.mxu0 %v997
    %1171 = vmatpush1.msra.mxu0 %v996
    %1172 = vmatprep.subr.mxu0 %v994
    %1173 = vmatpush1.msra.mxu0 %v993
    %1174 = vmatprep.subr.mxu0 %v991
    %1175 = vmatpush1.msra.mxu0 %v990
    %1176 = vmatprep.subr.mxu0 %v988
    %1177 = vmatpush1.msra.mxu0 %v987
    %1178 = vmatprep.subr.mxu0 %v985
    %1179 = vmatpush1.msra.mxu0 %v984
    %1180 = vmatprep.subr.mxu0 %v982
    %1181 = vmatpush1.msra.mxu0 %v981
    %1182 = vmatprep.subr.mxu0 %v979
    %1183 = vmatpush1.msra.mxu0 %v978
    %1184 = vmatprep.subr.mxu0 %v976
    %1185 = vmatpush1.msra.mxu0 %v975
    %1186 = vmatprep.subr.mxu0 %v973
    %1187 = vmatpush1.msra.mxu0 %v972
    %1188 = vmatprep.subr.mxu0 %v970
    %1189 = vmatpush1.msra.mxu0 %v969
    %1190 = vmatprep.subr.mxu0 %v967
    %1191 = vmatpush1.msra.mxu0 %v966
    %1192 = vmatprep.subr.mxu0 %v964
    %1193 = vmatpush1.msra.mxu0 %v963
    %1194 = vmatprep.subr.mxu0 %v961
    %1195 = vmatpush1.msra.mxu0 %v960
    %1196 = vmatprep.subr.mxu0 %v958
    %1197 = vmatpush1.msra.mxu0 %v957
    %1198 = vmatprep.subr.mxu0 %v1051
    %1199 = vmatpush2.msra.mxu0 %v1050
    %1200 = vmatprep.subr.mxu0 %v1048
    %1201 = vmatpush2.msra.mxu0 %v1047
    %1202 = vmatprep.subr.mxu0 %v1045
    %1203 = vmatpush2.msra.mxu0 %v1044
    %1204 = vmatprep.subr.mxu0 %v1042
    %1205 = vmatpush2.msra.mxu0 %v1041
    %1206 = vmatprep.subr.mxu0 %v1039
    %1207 = vmatpush2.msra.mxu0 %v1038
    %1208 = vmatprep.subr.mxu0 %v1036
    %1209 = vmatpush2.msra.mxu0 %v1035
    %1210 = vmatprep.subr.mxu0 %v1033
    %1211 = vmatpush2.msra.mxu0 %v1032
    %1212 = vmatprep.subr.mxu0 %v1030
    %1213 = vmatpush2.msra.mxu0 %v1029
    %1214 = vmatprep.subr.mxu0 %v1027
    %1215 = vmatpush2.msra.mxu0 %v1026
    %1216 = vmatprep.subr.mxu0 %v1024
    %1217 = vmatpush2.msra.mxu0 %v1023
    %1218 = vmatprep.subr.mxu0 %v1021
    %1219 = vmatpush2.msra.mxu0 %v1020
    %1220 = vmatprep.subr.mxu0 %v1018
    %1221 = vmatpush2.msra.mxu0 %v1017
    %1222 = vmatprep.subr.mxu0 %v1015
    %1223 = vmatpush2.msra.mxu0 %v1014
    %1224 = vmatprep.subr.mxu0 %v1012
    %1225 = vmatpush2.msra.mxu0 %v1011
    %1226 = vmatprep.subr.mxu0 %v1009
    %1227 = vmatpush2.msra.mxu0 %v1008
    %1228 = vmatprep.subr.mxu0 %v1006
    %1229 = vmatpush2.msra.mxu0 %v1005
    %1230 = vmatprep.mubr.f32.mxu0 %v460
    %1231 = vmatmul.mubr.f32.gmra.mxu0 %v459
    %v1232 = vpop.f32.mrf.mxu0
    %v1233 = vadd.f32 %v1154, %v1232
    %v1234 = vpop.f32.mrf.mxu0
    %v1235 = vadd.f32 %v1158, %v1234
    %1236 = vdwg.mxu0
    %1237 = vmatprep.subr.mxu0 %v1099
    %1238 = vmatpush1.msra.mxu0 %v1098
    %1239 = vmatprep.subr.mxu0 %v1096
    %1240 = vmatpush1.msra.mxu0 %v1095
    %1241 = vmatprep.subr.mxu0 %v1093
    %1242 = vmatpush1.msra.mxu0 %v1092
    %1243 = vmatprep.subr.mxu0 %v1090
    %1244 = vmatpush1.msra.mxu0 %v1089
    %1245 = vmatprep.subr.mxu0 %v1087
    %1246 = vmatpush1.msra.mxu0 %v1086
    %1247 = vmatprep.subr.mxu0 %v1084
    %1248 = vmatpush1.msra.mxu0 %v1083
    %1249 = vmatprep.subr.mxu0 %v1081
    %1250 = vmatpush1.msra.mxu0 %v1080
    %1251 = vmatprep.subr.mxu0 %v1078
    %1252 = vmatpush1.msra.mxu0 %v1077
    %1253 = vmatprep.subr.mxu0 %v1075
    %1254 = vmatpush1.msra.mxu0 %v1074
    %1255 = vmatprep.subr.mxu0 %v1072
    %1256 = vmatpush1.msra.mxu0 %v1071
    %1257 = vmatprep.subr.mxu0 %v1069
    %1258 = vmatpush1.msra.mxu0 %v1068
    %1259 = vmatprep.subr.mxu0 %v1066
    %1260 = vmatpush1.msra.mxu0 %v1065
    %1261 = vmatprep.subr.mxu0 %v1063
    %1262 = vmatpush1.msra.mxu0 %v1062
    %1263 = vmatprep.subr.mxu0 %v1060
    %1264 = vmatpush1.msra.mxu0 %v1059
    %1265 = vmatprep.subr.mxu0 %v1057
    %1266 = vmatpush1.msra.mxu0 %v1056
    %1267 = vmatprep.subr.mxu0 %v1054
    %1268 = vmatpush1.msra.mxu0 %v1053
    %1269 = vmatprep.subr.mxu0 %v1147
    %1270 = vmatpush2.msra.mxu0 %v1146
    %1271 = vmatprep.subr.mxu0 %v1144
    %1272 = vmatpush2.msra.mxu0 %v1143
    %1273 = vmatprep.subr.mxu0 %v1141
    %1274 = vmatpush2.msra.mxu0 %v1140
    %1275 = vmatprep.subr.mxu0 %v1138
    %1276 = vmatpush2.msra.mxu0 %v1137
    %1277 = vmatprep.subr.mxu0 %v1135
    %1278 = vmatpush2.msra.mxu0 %v1134
    %1279 = vmatprep.subr.mxu0 %v1132
    %1280 = vmatpush2.msra.mxu0 %v1131
    %1281 = vmatprep.subr.mxu0 %v1129
    %1282 = vmatpush2.msra.mxu0 %v1128
    %1283 = vmatprep.subr.mxu0 %v1126
    %1284 = vmatpush2.msra.mxu0 %v1125
    %1285 = vmatprep.subr.mxu0 %v1123
    %1286 = vmatpush2.msra.mxu0 %v1122
    %1287 = vmatprep.subr.mxu0 %v1120
    %1288 = vmatpush2.msra.mxu0 %v1119
    %1289 = vmatprep.subr.mxu0 %v1117
    %1290 = vmatpush2.msra.mxu0 %v1116
    %1291 = vmatprep.subr.mxu0 %v1114
    %1292 = vmatpush2.msra.mxu0 %v1113
    %1293 = vmatprep.subr.mxu0 %v1111
    %1294 = vmatpush2.msra.mxu0 %v1110
    %1295 = vmatprep.subr.mxu0 %v1108
    %1296 = vmatpush2.msra.mxu0 %v1107
    %1297 = vmatprep.subr.mxu0 %v1105
    %1298 = vmatpush2.msra.mxu0 %v1104
    %1299 = vmatprep.subr.mxu0 %v1102
    %1300 = vmatpush2.msra.mxu0 %v1101
    %1301 = vmatprep.mubr.f32.mxu0 %v462
    %1302 = vmatmul.mubr.f32.gmra.mxu0 %v461
    %v1303 = vpop.f32.mrf.mxu0
    %v1304 = vadd.f32 %v1233, %v1303
    %v1305 = vpop.f32.mrf.mxu0
    %v1306 = vadd.f32 %v1235, %v1305
    %1307 = vdwg.mxu0
    %1308 = vmatprep.subr.mxu0 0.0
    %1309 = vmatpush1.msra.mxu0 %v1004
    %1310 = vmatprep.subr.mxu0 0.0
    %1311 = vmatpush1.msra.mxu0 %v1001
    %1312 = vmatprep.subr.mxu0 0.0
    %1313 = vmatpush1.msra.mxu0 %v998
    %1314 = vmatprep.subr.mxu0 0.0
    %1315 = vmatpush1.msra.mxu0 %v995
    %1316 = vmatprep.subr.mxu0 0.0
    %1317 = vmatpush1.msra.mxu0 %v992
    %1318 = vmatprep.subr.mxu0 0.0
    %1319 = vmatpush1.msra.mxu0 %v989
    %1320 = vmatprep.subr.mxu0 0.0
    %1321 = vmatpush1.msra.mxu0 %v986
    %1322 = vmatprep.subr.mxu0 0.0
    %1323 = vmatpush1.msra.mxu0 %v983
    %1324 = vmatprep.subr.mxu0 0.0
    %1325 = vmatpush1.msra.mxu0 %v980
    %1326 = vmatprep.subr.mxu0 0.0
    %1327 = vmatpush1.msra.mxu0 %v977
    %1328 = vmatprep.subr.mxu0 0.0
    %1329 = vmatpush1.msra.mxu0 %v974
    %1330 = vmatprep.subr.mxu0 0.0
    %1331 = vmatpush1.msra.mxu0 %v971
    %1332 = vmatprep.subr.mxu0 0.0
    %1333 = vmatpush1.msra.mxu0 %v968
    %1334 = vmatprep.subr.mxu0 0.0
    %1335 = vmatpush1.msra.mxu0 %v965
    %1336 = vmatprep.subr.mxu0 0.0
    %1337 = vmatpush1.msra.mxu0 %v962
    %1338 = vmatprep.subr.mxu0 0.0
    %1339 = vmatpush1.msra.mxu0 %v959
    %1340 = vmatprep.subr.mxu0 0.0
    %1341 = vmatpush2.msra.mxu0 %v1052
    %1342 = vmatprep.subr.mxu0 0.0
    %1343 = vmatpush2.msra.mxu0 %v1049
    %1344 = vmatprep.subr.mxu0 0.0
    %1345 = vmatpush2.msra.mxu0 %v1046
    %1346 = vmatprep.subr.mxu0 0.0
    %1347 = vmatpush2.msra.mxu0 %v1043
    %1348 = vmatprep.subr.mxu0 0.0
    %1349 = vmatpush2.msra.mxu0 %v1040
    %1350 = vmatprep.subr.mxu0 0.0
    %1351 = vmatpush2.msra.mxu0 %v1037
    %1352 = vmatprep.subr.mxu0 0.0
    %1353 = vmatpush2.msra.mxu0 %v1034
    %1354 = vmatprep.subr.mxu0 0.0
    %1355 = vmatpush2.msra.mxu0 %v1031
    %1356 = vmatprep.subr.mxu0 0.0
    %1357 = vmatpush2.msra.mxu0 %v1028
    %1358 = vmatprep.subr.mxu0 0.0
    %1359 = vmatpush2.msra.mxu0 %v1025
    %1360 = vmatprep.subr.mxu0 0.0
    %1361 = vmatpush2.msra.mxu0 %v1022
    %1362 = vmatprep.subr.mxu0 0.0
    %1363 = vmatpush2.msra.mxu0 %v1019
    %1364 = vmatprep.subr.mxu0 0.0
    %1365 = vmatpush2.msra.mxu0 %v1016
    %1366 = vmatprep.subr.mxu0 0.0
    %1367 = vmatpush2.msra.mxu0 %v1013
    %1368 = vmatprep.subr.mxu0 0.0
    %1369 = vmatpush2.msra.mxu0 %v1010
    %1370 = vmatprep.subr.mxu0 0.0
    %1371 = vmatpush2.msra.mxu0 %v1007
    %1372 = vmatprep.mubr.f32.mxu0 %v460
    %1373 = vmatmul.mubr.f32.gmra.mxu0 %v459
    %v1374 = vpop.f32.mrf.mxu0
    %v1375 = vadd.f32 %v1162, %v1374
    %v1376 = vpop.f32.mrf.mxu0
    %1377 = vdwg.mxu0
    %1378 = vmatprep.subr.mxu0 0.0
    %1379 = vmatpush1.msra.mxu0 %v1100
    %1380 = vmatprep.subr.mxu0 0.0
    %1381 = vmatpush1.msra.mxu0 %v1097
    %1382 = vmatprep.subr.mxu0 0.0
    %1383 = vmatpush1.msra.mxu0 %v1094
    %1384 = vmatprep.subr.mxu0 0.0
    %1385 = vmatpush1.msra.mxu0 %v1091
    %1386 = vmatprep.subr.mxu0 0.0
    %1387 = vmatpush1.msra.mxu0 %v1088
    %1388 = vmatprep.subr.mxu0 0.0
    %1389 = vmatpush1.msra.mxu0 %v1085
    %1390 = vmatprep.subr.mxu0 0.0
    %1391 = vmatpush1.msra.mxu0 %v1082
    %1392 = vmatprep.subr.mxu0 0.0
    %1393 = vmatpush1.msra.mxu0 %v1079
    %1394 = vmatprep.subr.mxu0 0.0
    %1395 = vmatpush1.msra.mxu0 %v1076
    %1396 = vmatprep.subr.mxu0 0.0
    %1397 = vmatpush1.msra.mxu0 %v1073
    %1398 = vmatprep.subr.mxu0 0.0
    %1399 = vmatpush1.msra.mxu0 %v1070
    %1400 = vmatprep.subr.mxu0 0.0
    %1401 = vmatpush1.msra.mxu0 %v1067
    %1402 = vmatprep.subr.mxu0 0.0
    %1403 = vmatpush1.msra.mxu0 %v1064
    %1404 = vmatprep.subr.mxu0 0.0
    %1405 = vmatpush1.msra.mxu0 %v1061
    %1406 = vmatprep.subr.mxu0 0.0
    %1407 = vmatpush1.msra.mxu0 %v1058
    %1408 = vmatprep.subr.mxu0 0.0
    %1409 = vmatpush1.msra.mxu0 %v1055
    %1410 = vmatprep.subr.mxu0 0.0
    %1411 = vmatpush2.msra.mxu0 %v1148
    %1412 = vmatprep.subr.mxu0 0.0
    %1413 = vmatpush2.msra.mxu0 %v1145
    %1414 = vmatprep.subr.mxu0 0.0
    %1415 = vmatpush2.msra.mxu0 %v1142
    %1416 = vmatprep.subr.mxu0 0.0
    %1417 = vmatpush2.msra.mxu0 %v1139
    %1418 = vmatprep.subr.mxu0 0.0
    %1419 = vmatpush2.msra.mxu0 %v1136
    %1420 = vmatprep.subr.mxu0 0.0
    %1421 = vmatpush2.msra.mxu0 %v1133
    %1422 = vmatprep.subr.mxu0 0.0
    %1423 = vmatpush2.msra.mxu0 %v1130
    %1424 = vmatprep.subr.mxu0 0.0
    %1425 = vmatpush2.msra.mxu0 %v1127
    %1426 = vmatprep.subr.mxu0 0.0
    %1427 = vmatpush2.msra.mxu0 %v1124
    %1428 = vmatprep.subr.mxu0 0.0
    %1429 = vmatpush2.msra.mxu0 %v1121
    %1430 = vmatprep.subr.mxu0 0.0
    %1431 = vmatpush2.msra.mxu0 %v1118
    %1432 = vmatprep.subr.mxu0 0.0
    %1433 = vmatpush2.msra.mxu0 %v1115
    %1434 = vmatprep.subr.mxu0 0.0
    %1435 = vmatpush2.msra.mxu0 %v1112
    %1436 = vmatprep.subr.mxu0 0.0
    %1437 = vmatpush2.msra.mxu0 %v1109
    %1438 = vmatprep.subr.mxu0 0.0
    %1439 = vmatpush2.msra.mxu0 %v1106
    %1440 = vmatprep.subr.mxu0 0.0
    %1441 = vmatpush2.msra.mxu0 %v1103
    %1442 = vmatprep.mubr.f32.mxu0 %v462
    %1443 = vmatmul.mubr.f32.gmra.mxu0 %v461
    %v1444 = vpop.f32.mrf.mxu0
    %v1445 = vadd.f32 %v1375, %v1444
    %v1446 = vpop.f32.mrf.mxu0
    %1447 = vdwg.mxu0
    %v1448 = vmax.f32 %v1304, 0.0
    %v1449 = vmax.f32 %v1306, 0.0
    %v1450 = vmax.f32 %v1445, 0.0
    %v1451 = vld [vmem:[%s7] sm:$0x7]
    %v1453 = vlaneseq
    %v1454 = vshrl.u32 %v1453, 7
    %v1455 = vsub.s32 0, %v1454
    %v1456 = vrot.slane %v1451, %v1455
    %v1457 = vlaneseq
    %v1458 = vshrl.u32 %v1457, 7
    %v1459 = vsub.s32 1, %v1458
    %v1460 = vrot.slane %v1451, %v1459
    %v1461 = vlaneseq
    %v1462 = vshrl.u32 %v1461, 7
    %v1463 = vsub.s32 2, %v1462
    %v1464 = vrot.slane %v1451, %v1463
    %v1468 = vmul.f32 %v954, %v1456
    %v1469 = vmul.f32 %v955, %v1460
    %v1470 = vmul.f32 %v956, %v1464
    %v1471 = vadd.f32 %v1468, %v1469
    %v1472 = vadd.f32 %v1471, %v1470
    %1473 = vadd.xlane.f32.xlu0 %v1472
    %v1474 = vpop.xlane.xlu0 %1473
    %v1475 = vld [vmem:[%s8] sm:$0x7]
    %v1477 = vlaneseq
    %v1478 = vshrl.u32 %v1477, 7
    %v1479 = vsub.s32 0, %v1478
    %v1480 = vrot.slane %v1475, %v1479
    %v1481 = vlaneseq
    %v1482 = vshrl.u32 %v1481, 7
    %v1483 = vsub.s32 1, %v1482
    %v1484 = vrot.slane %v1475, %v1483
    %v1485 = vlaneseq
    %v1486 = vshrl.u32 %v1485, 7
    %v1487 = vsub.s32 2, %v1486
    %v1488 = vrot.slane %v1475, %v1487
    %v1492 = vmul.f32 %v1448, %v1480
    %v1493 = vmul.f32 %v1449, %v1484
    %v1494 = vmul.f32 %v1450, %v1488
    %v1495 = vadd.f32 %v1492, %v1493
    %v1496 = vadd.f32 %v1495, %v1494
    %1497 = vadd.xlane.f32.xlu0 %v1496
    %v1498 = vpop.xlane.xlu0 %1497
    %v1499 = vlaneseq
    %v1500 = vand.u32 %v1499, 127
    %vm1501 = vcmp.eq.s32.totalorder %v1500, 0
    %vm1502 = vcmp.eq.s32.totalorder %v1500, 1
    %v1503 = vsel %vm1502, %v1498, 0.0
    %v1504 = vsel %vm1501, %v1474, %v1503
    %v1505 = vld [vmem:[%s9] sm:$0x1]
    %v1507 = vlaneseq
    %v1508 = vshrl.u32 %v1507, 7
    %v1509 = vsub.s32 0, %v1508
    %v1510 = vrot.slane %v1505, %v1509
    %v1512 = vadd.f32 %v1504, %v1510
    %vm1513 = vcmask 64512
    %1514 = vst.msk [vmem:[#allocation11] sm:$0xff] %vm1513, %v1512
    // Predicated region
    $region62: #{tpu_custom_call.1} parent=1 // pred_check
      _
    $region63: #{tpu_custom_call.1} parent=1 // pred_check_branch
      %1516 = sbr.rel (0) target = $region65
    $region64: #{tpu_custom_call.1} parent=1 // pred_region
      %s1518 = ssub.s32 128, 128
      %1519 = vsyncadd [#allocation4], %s1518
      %s1521 = sshll.u32 [#allocation11], 4
      %s1522 = int_to_ptr.vmem [resolvable:$true] %s1521
      %1524 = dma.vmem_to_hbm [thread:$0]  %s1522, 128, %s10, [#allocation4]
    $region65: #{tpu_custom_call.1} parent=1 // pred_fallthru
      _
    // Predicated region
    $region66: #{tpu_custom_call.1} parent=1 // pred_check
      _
    $region67: #{tpu_custom_call.1} parent=1 // pred_check_branch
      %1526 = sbr.rel (0) target = $region69
    $region68: #{tpu_custom_call.1} parent=1 // pred_region
      %1527 = dma.done [#allocation4], 128
    $region69: #{tpu_custom_call.1} parent=1 // pred_fallthru
      _
    %1528 = vsyncpa [#allocation3], 1
    %1529 = vsyncpa [#allocation6], 1
    %1530 = vsyncpa [#allocation9], 1
    %1531 = vsyncpa [#allocation4], 1

</llo_original>
